<compile_context>
chip_gen: v6e
topology: v6e:2x2x1
jax: 0.10.0
libtpu: 0.0.40
codegen_flags: <defaults>
</compile_context>

<pallas_src>
import jax
import jax.numpy as jnp
from jax.experimental import pallas as pl
from jax.experimental.pallas import tpu as pltpu


def _round_up(x, m):
    return ((x + m - 1) // m) * m


def _physical_vmem_bytes():
    """Best-effort physical VMEM per TensorCore; conservative 64 MiB fallback."""
    try:
        info = pltpu.get_tpu_info()
        for name in ("vmem_capacity_bytes", "vmem_size_bytes", "vmem_bytes"):
            v = getattr(info, name, None)
            if v:
                return int(v)
    except Exception:
        pass
    try:
        kind = jax.devices()[0].device_kind.lower()
        if any(t in kind for t in ("v4", "v5", "v6")):   # 128 MiB parts
            return 128 * 1024 * 1024
    except Exception:
        pass
    return 64 * 1024 * 1024                              # v7x / unknown


def cross_attention(x1, x2, params, *, mxu_bf16=True, tq=None):
    """CrossAttention forward.

    x1, x2: (B, C, H, W) float32 (NCHW, like PyTorch).
    Returns two (B, 1, H, W) per-pixel abs-channel-sum maps.
    mxu_bf16=True is the fast path for v6e/v7x; pass False on v5e (f32 VPU/EUP)
    or when tight numerics are needed.
    """
    B, C, H, W = x1.shape
    HW = H * W
    f32 = jnp.float32

    wq, bq = params["wq"], params["bq"]     # (C, Cq), (Cq,)
    wk, bk = params["wk"], params["bk"]
    wv, bv = params["wv"], params["bv"]     # (C, C),  (C,)
    wc, bc = params["wc"], params["bc"]     # (2C, C), (C,)
    Cq = wq.shape[1]
    assert Cq >= 1, "in_channels must be >= 8 (Conv2d(C, C // 8, 1))"

    # ---- static geometry -----------------------------------------------------
    HWp = _round_up(HW, 128)                 # lane-aligned spatial extent
    in_dt = jnp.bfloat16 if mxu_bf16 else f32
    seg_align = 16 if mxu_bf16 else 8        # keep scratch segments tile-aligned
    Cqp = _round_up(Cq, seg_align)           # q / k segment rows (zero-padded)
    Cp1 = _round_up(C + 1, seg_align)        # folded-V rows + constant-ones row
    Cb = _round_up(C, 8)                     # combine(x1) base rows (always f32)
    Rqkv = 2 * Cqp + Cp1                     # fused QKV projection rows
    Q_OFF, K_OFF, V_OFF = 0, Cqp, 2 * Cqp

    # ---- VMEM-aware tile size / limit -----------------------------------------
    phys_vmem = _physical_vmem_bytes()
    e_bytes = 2 if mxu_bf16 else 4
    fixed_vmem = (2 * 2 * C * HWp * e_bytes              # x1/x2 blocks, double-buffered
                  + 2 * Rqkv * HWp * e_bytes             # persistent QKV scratch
                  + Cb * HWp * 4                         # persistent base scratch
                  + 2 * (Rqkv + Cb) * (C * e_bytes + 4)) # weights + bias columns
    per_q_bytes = (4 + e_bytes + 8) * HWp                # scores + probs + slack / row

    if tq is None:
        budget = max(phys_vmem - 8 * (1 << 20) - fixed_vmem, 4 * (1 << 20))
        tq = 128
        for cand in (512, 256, 128):
            if HWp % cand == 0 and cand * per_q_bytes <= budget:
                tq = cand
                break
    assert tq % 128 == 0 and HWp % tq == 0
    nq = HWp // tq

    # ---- fused projection weights [Wq^T | Wk^T | (Wv Wc_att)^T | ones-row] ----
    # The combine conv's attended half is folded into V (exact up to
    # reassociation; the bias folds because softmax rows sum to 1).
    wv_fold = (wv @ wc[C:]).T                # (C, C)
    bv_fold = wc[C:].T @ bv                  # (C,)

    wqkv = jnp.zeros((Rqkv, C), f32)
    wqkv = wqkv.at[Q_OFF:Q_OFF + Cq].set(wq.T)
    wqkv = wqkv.at[K_OFF:K_OFF + Cq].set(wk.T)
    wqkv = wqkv.at[V_OFF:V_OFF + C].set(wv_fold)

    bqkv = jnp.zeros((Rqkv,), f32)
    bqkv = bqkv.at[Q_OFF:Q_OFF + Cq].set(bq)
    bqkv = bqkv.at[K_OFF:K_OFF + Cq].set(bk)
    bqkv = bqkv.at[V_OFF:V_OFF + C].set(bv_fold)
    bqkv = bqkv.at[V_OFF + C].set(1.0)       # ones row -> softmax row sums via PV
    bqkv = bqkv.reshape(Rqkv, 1)

    wbase = jnp.zeros((Cb, C), f32).at[:C].set(wc[:C].T)          # combine(x1) half
    bbase = jnp.zeros((Cb,), f32).at[:C].set(bc).reshape(Cb, 1)

    # ---- inputs: NCHW -> channels-first (C, HW), zero-pad HW, cast ------------
    x1f = x1.reshape(B, C, HW).astype(f32)
    x2f = x2.reshape(B, C, HW).astype(f32)
    if HWp != HW:
        pad = ((0, 0), (0, 0), (0, HWp - HW))
        x1f = jnp.pad(x1f, pad)
        x2f = jnp.pad(x2f, pad)
    x1f = x1f.astype(in_dt)
    x2f = x2f.astype(in_dt)
    wqkv_in = wqkv.astype(in_dt)
    wbase_in = wbase.astype(in_dt)

    def kernel(x1_ref, x2_ref, wqkv_ref, bqkv_ref, wbase_ref, bbase_ref,
               out_ref, qkv1_s, qkv2_s, base_s):
        qi = pl.program_id(1)

        # Per-batch fused projections, once, cast into the (bf16) scratch.
        @pl.when(qi == 0)
        def _():
            w = wqkv_ref[...]                             # (Rqkv, C)
            b = bqkv_ref[...]                             # (Rqkv, 1) f32
            xa = x1_ref[0]                                # (C, HWp)
            xb = x2_ref[0]

            def project(x):
                p = jnp.dot(w, x, preferred_element_type=jnp.float32) + b
                if HWp != HW:
                    # Zero padded key columns ONCE: padded keys then contribute
                    # 0 to PV and to the ones-row denominator, so no per-tile
                    # score mask is needed (softmax shift-invariance).
                    col = jax.lax.broadcasted_iota(jnp.int32, p.shape, 1)
                    p = jnp.where(col < HW, p, 0.0)
                return p.astype(in_dt)

            qkv1_s[...] = project(xa)
            qkv2_s[...] = project(xb)
            base_s[...] = (jnp.dot(wbase_ref[...], xa,
                                   preferred_element_type=jnp.float32)
                           + bbase_ref[...])              # (Cb, HWp) f32

        q_off = pl.multiple_of(qi * tq, tq)
        base = base_s[0:C, pl.ds(q_off, tq)]              # (C, tq): Wc_x1^T x1 + bc

        def branch(qk_s, v_s):
            q = qk_s[Q_OFF:Q_OFF + Cqp, pl.ds(q_off, tq)]  # (Cqp, tq)
            k = qk_s[K_OFF:K_OFF + Cqp, :]                 # (Cqp, HWp)
            v = v_s[V_OFF:V_OFF + Cp1, :]                  # (Cp1, HWp); row C == 1
            # scores[j, i] = <q[:, j], k[:, i]>
            s = jax.lax.dot_general(q, k, (((0,), (0,)), ((), ())),
                                    preferred_element_type=jnp.float32)   # (tq, HWp)
            s = s - jnp.max(s, axis=-1, keepdims=True)
            if mxu_bf16:
                p = jnp.exp(s.astype(jnp.bfloat16))        # bf16 EUP path (v6e/v7x)
            else:
                p = jnp.exp(s)
            # pv[c, j] = sum_i v[c, i] * p[j, i]; row C carries the row sums.
            pv = jax.lax.dot_general(v, p, (((1,), (1,)), ((), ())),
                                     preferred_element_type=jnp.float32)  # (Cp1, tq)
            inv = pl.reciprocal(pv[C:C + 1, :], approx=mxu_bf16)           # (1, tq)
            comb = base + pv[:C, :] * inv                                  # (C, tq)
            return jnp.sum(jnp.abs(comb), axis=0, keepdims=True)           # (1, tq)

        # Branch 1 is computed and stored fully before branch 2 (shorter live
        # ranges, no concat copy).  NB: both branches combine with x1 (spec).
        out_ref[0, 0:1, :] = branch(qkv1_s, qkv2_s)       # q1,k1 from x1; v from x2
        out_ref[0, 1:2, :] = branch(qkv2_s, qkv1_s)       # q2,k2 from x2; v from x1

    # ---- scheduler / VMEM hints ------------------------------------------------
    flops = (2 * B * (2 * Rqkv + Cb) * C * HWp            # fused projections
             + 2 * B * 2 * (Cqp + Cp1) * HWp * HWp)       # scores + PV, both branches
    cost = pl.CostEstimate(
        flops=int(flops),
        transcendentals=int(2 * B * HWp * HWp),
        bytes_accessed=int(e_bytes * 2 * B * C * HWp
                           + e_bytes * (Rqkv + Cb) * C + 4 * (Rqkv + Cb)
                           + 4 * 2 * B * HWp))

    vmem_est = fixed_vmem + tq * per_q_bytes + 2 * 2 * tq * 4 + (2 << 20)
    vmem_limit = int(min(phys_vmem - 8 * (1 << 20),
                         max(32 * (1 << 20), vmem_est)))

    grid_spec = pltpu.PrefetchScalarGridSpec(
        num_scalar_prefetch=0,
        grid=(B, nq),
        in_specs=[
            pl.BlockSpec((1, C, HWp), lambda b, q: (b, 0, 0)),   # x1 (channels-first)
            pl.BlockSpec((1, C, HWp), lambda b, q: (b, 0, 0)),   # x2
            pl.BlockSpec((Rqkv, C), lambda b, q: (0, 0)),        # fused QKV weights
            pl.BlockSpec((Rqkv, 1), lambda b, q: (0, 0)),        # fused QKV bias col
            pl.BlockSpec((Cb, C), lambda b, q: (0, 0)),          # combine(x1) weights
            pl.BlockSpec((Cb, 1), lambda b, q: (0, 0)),          # combine(x1) bias col
        ],
        out_specs=pl.BlockSpec((1, 2, tq), lambda b, q: (b, 0, q)),
        scratch_shapes=[pltpu.VMEM((Rqkv, HWp), in_dt),          # x1 Q/K/V' (+ones)
                        pltpu.VMEM((Rqkv, HWp), in_dt),          # x2 Q/K/V' (+ones)
                        pltpu.VMEM((Cb, HWp), f32)],             # combine(x1) base
    )

    out = pl.pallas_call(
        kernel,
        out_shape=jax.ShapeDtypeStruct((B, 2, HWp), f32),
        grid_spec=grid_spec,
        compiler_params=pltpu.CompilerParams(
            dimension_semantics=("parallel", "arbitrary"),
            vmem_limit_bytes=vmem_limit),
        cost_estimate=cost,
    )(x1f, x2f, wqkv_in, bqkv, wbase_in, bbase)

    o1 = out[:, 0, :HW].reshape(B, 1, H, W)
    o2 = out[:, 1, :HW].reshape(B, 1, H, W)
    return o1, o2


def reference_forward(x1, x2, params):
    """Pure-JAX mirror of the PyTorch CrossAttention.forward (for validation)."""
    B, C, H, W = x1.shape
    HW = H * W
    x1f = x1.reshape(B, C, HW)
    x2f = x2.reshape(B, C, HW)

    def conv1x1(x, w, b):                     # x: (B, Cin, HW), w: (Cin, Cout)
        return jnp.einsum("io,bin->bon", w, x) + b[None, :, None]

    wq, bq = params["wq"], params["bq"]
    wk, bk = params["wk"], params["bk"]
    wv, bv = params["wv"], params["bv"]
    wc, bc = params["wc"], params["bc"]

    q1 = conv1x1(x1f, wq, bq); k1 = conv1x1(x1f, wk, bk); v1 = conv1x1(x1f, wv, bv)
    q2 = conv1x1(x2f, wq, bq); k2 = conv1x1(x2f, wk, bk); v2 = conv1x1(x2f, wv, bv)

    def branch(q, k, v_other):
        attn = jax.nn.softmax(jnp.einsum("bcq,bck->bqk", q, k), axis=-1)
        attended = jnp.einsum("bci,bji->bcj", v_other, attn)
        comb = conv1x1(jnp.concatenate([x1f, attended], axis=1), wc, bc)
        return jnp.abs(comb).sum(axis=1).reshape(B, 1, H, W)

    # NB: the PyTorch module concatenates x1 (not x2) in BOTH combine calls.
    return branch(q1, k1, v2), branch(q2, k2, v1)


def init_params(key, in_channels):
    C = in_channels
    Cq = C // 8
    ks = jax.random.split(key, 8)

    def u(k, shape, fan_in):
        bound = 1.0 / jnp.sqrt(fan_in)
        return jax.random.uniform(k, shape, jnp.float32, -bound, bound)

    # Weights stored as (Cin, Cout) == PyTorch conv weight[:, :, 0, 0].T
    return {
        "wq": u(ks[0], (C, Cq), C),  "bq": u(ks[1], (Cq,), C),
        "wk": u(ks[2], (C, Cq), C),  "bk": u(ks[3], (Cq,), C),
        "wv": u(ks[4], (C, C), C),   "bv": u(ks[5], (C,), C),
        "wc": u(ks[6], (2 * C, C), 2 * C), "bc": u(ks[7], (C,), 2 * C),
    }


if __name__ == "__main__":
    B, C, H, W = 2, 16, 8, 8          # in_channels=16 -> query/key channels = 2
    key = jax.random.PRNGKey(0)
    kx1, kx2, kp = jax.random.split(key, 3)
    x1 = jax.random.normal(kx1, (B, C, H, W), jnp.float32)
    x2 = jax.random.normal(kx2, (B, C, H, W), jnp.float32)
    params = init_params(kp, C)

    r1, r2 = reference_forward(x1, x2, params)

    # f32 MXU path: tight check against the pure-JAX reference.
    o1, o2 = cross_attention(x1, x2, params, mxu_bf16=False)
    o1 = jax.block_until_ready(o1)
    o2 = jax.block_until_ready(o2)
    assert o1.shape == (B, 1, H, W) and o2.shape == (B, 1, H, W)
    assert jnp.allclose(o1, r1, rtol=2e-4, atol=2e-3), "f32 output1 mismatch"
    assert jnp.allclose(o2, r2, rtol=2e-4, atol=2e-3), "f32 output2 mismatch"

    # bf16 fast path (default; v6e/v7x): bf16 inputs / scratch / exp, so the
    # tolerance is purely about bf16 rounding on the same math.
    b1, b2 = cross_attention(x1, x2, params, mxu_bf16=True)
    b1 = jax.block_until_ready(b1)
    b2 = jax.block_until_ready(b2)
    assert jnp.allclose(b1, r1, rtol=1e-1, atol=5e-1), "bf16 output1 mismatch"
    assert jnp.allclose(b2, r2, rtol=1e-1, atol=5e-1), "bf16 output2 mismatch"

    print("KERNEL_OK")
</pallas_src>

<mosaic_0001>
module attributes {stable_mosaic.version = 11 : i64} {
  func.func @kernel(%arg0: i32, %arg1: i32, %arg2: memref<1x16x128xf32, #tpu.memory_space<vmem>>, %arg3: memref<1x16x128xf32, #tpu.memory_space<vmem>>, %arg4: memref<40x16xf32, #tpu.memory_space<vmem>>, %arg5: memref<40x1xf32, #tpu.memory_space<vmem>>, %arg6: memref<16x16xf32, #tpu.memory_space<vmem>>, %arg7: memref<16x1xf32, #tpu.memory_space<vmem>>, %arg8: memref<1x2x128xf32, #tpu.memory_space<vmem>>, %arg9: memref<40x128xf32, #tpu.memory_space<vmem>>, %arg10: memref<40x128xf32, #tpu.memory_space<vmem>>, %arg11: memref<16x128xf32, #tpu.memory_space<vmem>>) attributes {dimension_semantics = [#tpu.dimension_semantics<parallel>, #tpu.dimension_semantics<arbitrary>], iteration_bounds = array<i64: 2, 1>, scalar_prefetch = 0 : i64, scratch_operands = 3 : i64, tpu.core_type = #tpu.core_type<tc>, window_params = [{transform_indices = @transform_0, window_bounds = array<i64: 1, 16, 128>}, {transform_indices = @transform_1, window_bounds = array<i64: 1, 16, 128>}, {pipeline_mode = #tpu.pipeline_mode<synchronous>, transform_indices = @transform_2, window_bounds = array<i64: 40, 16>}, {pipeline_mode = #tpu.pipeline_mode<synchronous>, transform_indices = @transform_3, window_bounds = array<i64: 40, 1>}, {pipeline_mode = #tpu.pipeline_mode<synchronous>, transform_indices = @transform_4, window_bounds = array<i64: 16, 16>}, {pipeline_mode = #tpu.pipeline_mode<synchronous>, transform_indices = @transform_5, window_bounds = array<i64: 16, 1>}, {transform_indices = @transform_6, window_bounds = array<i64: 1, 2, 128>}]} {
    %c0_i32 = arith.constant 0 : i32
    %0 = arith.cmpi eq, %arg1, %c0_i32 : i32
    %1 = arith.extui %0 : i1 to i32
    %c0_i32_0 = arith.constant 0 : i32
    %2 = arith.cmpi ne, %1, %c0_i32_0 : i32
    scf.if %2 {
      %c0_21 = arith.constant 0 : index
      %c0_22 = arith.constant 0 : index
      %53 = vector.load %arg4[%c0_21, %c0_22] : memref<40x16xf32, #tpu.memory_space<vmem>>, vector<40x16xf32>
      %c0_23 = arith.constant 0 : index
      %c0_24 = arith.constant 0 : index
      %54 = vector.load %arg5[%c0_23, %c0_24] : memref<40x1xf32, #tpu.memory_space<vmem>>, vector<40x1xf32>
      %c0_25 = arith.constant 0 : index
      %c0_26 = arith.constant 0 : index
      %c0_27 = arith.constant 0 : index
      %55 = vector.load %arg2[%c0_25, %c0_26, %c0_27] : memref<1x16x128xf32, #tpu.memory_space<vmem>>, vector<1x16x128xf32>
      %56 = vector.shape_cast %55 : vector<1x16x128xf32> to vector<16x128xf32>
      %c0_28 = arith.constant 0 : index
      %c0_29 = arith.constant 0 : index
      %c0_30 = arith.constant 0 : index
      %57 = vector.load %arg3[%c0_28, %c0_29, %c0_30] : memref<1x16x128xf32, #tpu.memory_space<vmem>>, vector<1x16x128xf32>
      %58 = vector.shape_cast %57 : vector<1x16x128xf32> to vector<16x128xf32>
      %cst_31 = arith.constant dense<0.000000e+00> : vector<40x128xf32>
      %59 = tpu.matmul %53, %56, %cst_31 {dimension_numbers = #tpu.dot_dimension_numbers<[1], [0], [0], [1], [0, 0, 1, 1], [], []>} : vector<40x16xf32>, vector<16x128xf32>, vector<40x128xf32> -> vector<40x128xf32>
      %60 = vector.broadcast %54 : vector<40x1xf32> to vector<40x128xf32>
      %61 = arith.addf %59, %60 : vector<40x128xf32>
      %62 = tpu.iota {dimensions = array<i32: 1>} : vector<40x128xi32>
      %c64_i32 = arith.constant 64 : i32
      %63 = vector.broadcast %c64_i32 : i32 to vector<40x128xi32>
      %64 = arith.cmpi slt, %62, %63 : vector<40x128xi32>
      %cst_32 = arith.constant 0.000000e+00 : f32
      %65 = vector.broadcast %cst_32 : f32 to vector<40x128xf32>
      %66 = arith.select %64, %61, %65 : vector<40x128xi1>, vector<40x128xf32>
      %c0_33 = arith.constant 0 : index
      %c0_34 = arith.constant 0 : index
      %67 = vector.load %arg9[%c0_33, %c0_34] : memref<40x128xf32, #tpu.memory_space<vmem>>, vector<40x128xf32>
      tpu.vector_store %arg9[%c0_33, %c0_34], %66 {strides = array<i32>} : memref<40x128xf32, #tpu.memory_space<vmem>>, vector<40x128xf32>,
      %cst_35 = arith.constant dense<0.000000e+00> : vector<40x128xf32>
      %68 = tpu.matmul %53, %58, %cst_35 {dimension_numbers = #tpu.dot_dimension_numbers<[1], [0], [0], [1], [0, 0, 1, 1], [], []>} : vector<40x16xf32>, vector<16x128xf32>, vector<40x128xf32> -> vector<40x128xf32>
      %69 = vector.broadcast %54 : vector<40x1xf32> to vector<40x128xf32>
      %70 = arith.addf %68, %69 : vector<40x128xf32>
      %71 = tpu.iota {dimensions = array<i32: 1>} : vector<40x128xi32>
      %c64_i32_36 = arith.constant 64 : i32
      %72 = vector.broadcast %c64_i32_36 : i32 to vector<40x128xi32>
      %73 = arith.cmpi slt, %71, %72 : vector<40x128xi32>
      %cst_37 = arith.constant 0.000000e+00 : f32
      %74 = vector.broadcast %cst_37 : f32 to vector<40x128xf32>
      %75 = arith.select %73, %70, %74 : vector<40x128xi1>, vector<40x128xf32>
      %c0_38 = arith.constant 0 : index
      %c0_39 = arith.constant 0 : index
      %76 = vector.load %arg10[%c0_38, %c0_39] : memref<40x128xf32, #tpu.memory_space<vmem>>, vector<40x128xf32>
      tpu.vector_store %arg10[%c0_38, %c0_39], %75 {strides = array<i32>} : memref<40x128xf32, #tpu.memory_space<vmem>>, vector<40x128xf32>,
      %c0_40 = arith.constant 0 : index
      %c0_41 = arith.constant 0 : index
      %77 = vector.load %arg6[%c0_40, %c0_41] : memref<16x16xf32, #tpu.memory_space<vmem>>, vector<16x16xf32>
      %cst_42 = arith.constant dense<0.000000e+00> : vector<16x128xf32>
      %78 = tpu.matmul %77, %56, %cst_42 {dimension_numbers = #tpu.dot_dimension_numbers<[1], [0], [0], [1], [0, 0, 1, 1], [], []>} : vector<16x16xf32>, vector<16x128xf32>, vector<16x128xf32> -> vector<16x128xf32>
      %c0_43 = arith.constant 0 : index
      %c0_44 = arith.constant 0 : index
      %79 = vector.load %arg7[%c0_43, %c0_44] : memref<16x1xf32, #tpu.memory_space<vmem>>, vector<16x1xf32>
      %80 = vector.broadcast %79 : vector<16x1xf32> to vector<16x128xf32>
      %81 = arith.addf %78, %80 : vector<16x128xf32>
      %c0_45 = arith.constant 0 : index
      %c0_46 = arith.constant 0 : index
      %82 = vector.load %arg11[%c0_45, %c0_46] : memref<16x128xf32, #tpu.memory_space<vmem>>, vector<16x128xf32>
      tpu.vector_store %arg11[%c0_45, %c0_46], %81 {strides = array<i32>} : memref<16x128xf32, #tpu.memory_space<vmem>>, vector<16x128xf32>,
    } else {
    }
    %c128_i32 = arith.constant 128 : i32
    %3 = arith.muli %arg1, %c128_i32 : i32
    %4 = tpu.assume_multiple %3, 128 : i32
    %c0 = arith.constant 0 : index
    %5 = arith.index_cast %4 : i32 to index
    %6 = vector.load %arg11[%c0, %5] : memref<16x128xf32, #tpu.memory_space<vmem>>, vector<16x128xf32>
    %c0_1 = arith.constant 0 : index
    %7 = arith.index_cast %4 : i32 to index
    %8 = vector.load %arg9[%c0_1, %7] : memref<40x128xf32, #tpu.memory_space<vmem>>, vector<8x128xf32>
    %c8 = arith.constant 8 : index
    %c0_2 = arith.constant 0 : index
    %9 = vector.load %arg9[%c8, %c0_2] : memref<40x128xf32, #tpu.memory_space<vmem>>, vector<8x128xf32>
    %c16 = arith.constant 16 : index
    %c0_3 = arith.constant 0 : index
    %10 = vector.load %arg10[%c16, %c0_3] : memref<40x128xf32, #tpu.memory_space<vmem>>, vector<24x128xf32>
    %cst = arith.constant dense<0.000000e+00> : vector<128x128xf32>
    %11 = tpu.matmul %8, %9, %cst {dimension_numbers = #tpu.dot_dimension_numbers<[0], [0], [1], [1], [0, 1, 1, 1], [], []>} : vector<8x128xf32>, vector<8x128xf32>, vector<128x128xf32> -> vector<128x128xf32>
    %cst_4 = arith.constant dense<0xFF800000> : vector<128xf32>
    %12 = vector.multi_reduction <maximumf>, %11, %cst_4 [1] : vector<128x128xf32> to vector<128xf32>
    %13 = vector.shape_cast %12 : vector<128xf32> to vector<128x1xf32>
    %14 = vector.broadcast %13 : vector<128x1xf32> to vector<128x128xf32>
    %15 = arith.subf %11, %14 : vector<128x128xf32>
    %16 = math.exp %15 : vector<128x128xf32>
    %cst_5 = arith.constant dense<0.000000e+00> : vector<24x128xf32>
    %17 = tpu.matmul %10, %16, %cst_5 {dimension_numbers = #tpu.dot_dimension_numbers<[1], [1], [0], [0], [0, 0, 1, 0], [], []>} : vector<24x128xf32>, vector<128x128xf32>, vector<24x128xf32> -> vector<24x128xf32>
    %18 = vector.extract_strided_slice %17 {offsets = [16, 0], sizes = [1, 128], strides = [1, 1]} : vector<24x128xf32> to vector<1x128xf32>
    %19 = tpu.reciprocal %18 : vector<1x128xf32> -> vector<1x128xf32>
    %20 = vector.extract_strided_slice %17 {offsets = [0, 0], sizes = [16, 128], strides = [1, 1]} : vector<24x128xf32> to vector<16x128xf32>
    %21 = vector.broadcast %19 : vector<1x128xf32> to vector<16x128xf32>
    %22 = arith.mulf %20, %21 : vector<16x128xf32>
    %23 = arith.addf %6, %22 : vector<16x128xf32>
    %24 = math.absf %23 : vector<16x128xf32>
    %cst_6 = arith.constant dense<0.000000e+00> : vector<128xf32>
    %25 = vector.multi_reduction <add>, %24, %cst_6 [0] : vector<16x128xf32> to vector<128xf32>
    %26 = vector.shape_cast %25 : vector<128xf32> to vector<1x128xf32>
    %c0_7 = arith.constant 0 : index
    %c0_8 = arith.constant 0 : index
    %c0_9 = arith.constant 0 : index
    %27 = vector.load %arg8[%c0_7, %c0_8, %c0_9] : memref<1x2x128xf32, #tpu.memory_space<vmem>>, vector<1x1x128xf32>
    %28 = vector.shape_cast %27 : vector<1x1x128xf32> to vector<1x128xf32>
    %29 = vector.shape_cast %26 : vector<1x128xf32> to vector<1x1x128xf32>
    tpu.vector_store %arg8[%c0_7, %c0_8, %c0_9], %29 {strides = array<i32>} : memref<1x2x128xf32, #tpu.memory_space<vmem>>, vector<1x1x128xf32>,
    %c0_10 = arith.constant 0 : index
    %30 = arith.index_cast %4 : i32 to index
    %31 = vector.load %arg10[%c0_10, %30] : memref<40x128xf32, #tpu.memory_space<vmem>>, vector<8x128xf32>
    %c8_11 = arith.constant 8 : index
    %c0_12 = arith.constant 0 : index
    %32 = vector.load %arg10[%c8_11, %c0_12] : memref<40x128xf32, #tpu.memory_space<vmem>>, vector<8x128xf32>
    %c16_13 = arith.constant 16 : index
    %c0_14 = arith.constant 0 : index
    %33 = vector.load %arg9[%c16_13, %c0_14] : memref<40x128xf32, #tpu.memory_space<vmem>>, vector<24x128xf32>
    %cst_15 = arith.constant dense<0.000000e+00> : vector<128x128xf32>
    %34 = tpu.matmul %31, %32, %cst_15 {dimension_numbers = #tpu.dot_dimension_numbers<[0], [0], [1], [1], [0, 1, 1, 1], [], []>} : vector<8x128xf32>, vector<8x128xf32>, vector<128x128xf32> -> vector<128x128xf32>
    %cst_16 = arith.constant dense<0xFF800000> : vector<128xf32>
    %35 = vector.multi_reduction <maximumf>, %34, %cst_16 [1] : vector<128x128xf32> to vector<128xf32>
    %36 = vector.shape_cast %35 : vector<128xf32> to vector<128x1xf32>
    %37 = vector.broadcast %36 : vector<128x1xf32> to vector<128x128xf32>
    %38 = arith.subf %34, %37 : vector<128x128xf32>
    %39 = math.exp %38 : vector<128x128xf32>
    %cst_17 = arith.constant dense<0.000000e+00> : vector<24x128xf32>
    %40 = tpu.matmul %33, %39, %cst_17 {dimension_numbers = #tpu.dot_dimension_numbers<[1], [1], [0], [0], [0, 0, 1, 0], [], []>} : vector<24x128xf32>, vector<128x128xf32>, vector<24x128xf32> -> vector<24x128xf32>
    %41 = vector.extract_strided_slice %40 {offsets = [16, 0], sizes = [1, 128], strides = [1, 1]} : vector<24x128xf32> to vector<1x128xf32>
    %42 = tpu.reciprocal %41 : vector<1x128xf32> -> vector<1x128xf32>
    %43 = vector.extract_strided_slice %40 {offsets = [0, 0], sizes = [16, 128], strides = [1, 1]} : vector<24x128xf32> to vector<16x128xf32>
    %44 = vector.broadcast %42 : vector<1x128xf32> to vector<16x128xf32>
    %45 = arith.mulf %43, %44 : vector<16x128xf32>
    %46 = arith.addf %6, %45 : vector<16x128xf32>
    %47 = math.absf %46 : vector<16x128xf32>
    %cst_18 = arith.constant dense<0.000000e+00> : vector<128xf32>
    %48 = vector.multi_reduction <add>, %47, %cst_18 [0] : vector<16x128xf32> to vector<128xf32>
    %49 = vector.shape_cast %48 : vector<128xf32> to vector<1x128xf32>
    %c0_19 = arith.constant 0 : index
    %c1 = arith.constant 1 : index
    %c0_20 = arith.constant 0 : index
    %50 = vector.load %arg8[%c0_19, %c1, %c0_20] : memref<1x2x128xf32, #tpu.memory_space<vmem>>, vector<1x1x128xf32>
    %51 = vector.shape_cast %50 : vector<1x1x128xf32> to vector<1x128xf32>
    %52 = vector.shape_cast %49 : vector<1x128xf32> to vector<1x1x128xf32>
    tpu.vector_store %arg8[%c0_19, %c1, %c0_20], %52 {strides = array<i32>} : memref<1x2x128xf32, #tpu.memory_space<vmem>>, vector<1x1x128xf32>,
    return
  }
  func.func @transform_0(%arg0: i32, %arg1: i32) -> (i32, i32, i32) {
    %c0_i32 = arith.constant 0 : i32
    %c0_i32_0 = arith.constant 0 : i32
    %c0_i32_1 = arith.constant 0 : i32
    return %arg0, %c0_i32, %c0_i32_0 : i32, i32, i32
  }
  func.func @transform_1(%arg0: i32, %arg1: i32) -> (i32, i32, i32) {
    %c0_i32 = arith.constant 0 : i32
    %c0_i32_0 = arith.constant 0 : i32
    %c0_i32_1 = arith.constant 0 : i32
    return %arg0, %c0_i32, %c0_i32_0 : i32, i32, i32
  }
  func.func @transform_2(%arg0: i32, %arg1: i32) -> (i32, i32) {
    %c0_i32 = arith.constant 0 : i32
    %c0_i32_0 = arith.constant 0 : i32
    %c0_i32_1 = arith.constant 0 : i32
    return %c0_i32, %c0_i32_0 : i32, i32
  }
  func.func @transform_3(%arg0: i32, %arg1: i32) -> (i32, i32) {
    %c0_i32 = arith.constant 0 : i32
    %c0_i32_0 = arith.constant 0 : i32
    %c0_i32_1 = arith.constant 0 : i32
    return %c0_i32, %c0_i32_0 : i32, i32
  }
  func.func @transform_4(%arg0: i32, %arg1: i32) -> (i32, i32) {
    %c0_i32 = arith.constant 0 : i32
    %c0_i32_0 = arith.constant 0 : i32
    %c0_i32_1 = arith.constant 0 : i32
    return %c0_i32, %c0_i32_0 : i32, i32
  }
  func.func @transform_5(%arg0: i32, %arg1: i32) -> (i32, i32) {
    %c0_i32 = arith.constant 0 : i32
    %c0_i32_0 = arith.constant 0 : i32
    %c0_i32_1 = arith.constant 0 : i32
    return %c0_i32, %c0_i32_0 : i32, i32
  }
  func.func @transform_6(%arg0: i32, %arg1: i32) -> (i32, i32, i32) {
    %c0_i32 = arith.constant 0 : i32
    %c0_i32_0 = arith.constant 0 : i32
    return %arg0, %c0_i32, %arg1 : i32, i32, i32
  }
}

</mosaic_0001>

<llo_original>
// kernel: tpu_custom_call.1
$region0: #{tpu_custom_call.1}
  #allocation0 [shape = 'u32[]', space=smem, size = 0x4, offset = 0x4, fixed_abs, tag = 'smem constant byte address 0x4 - core index']
  #allocation1 [shape = 'u32[144,128]{1,0:T(1,128)}', space=vmem, size = 0x12000, scoped, tag = 'internal scratch']
  #allocation2 [shape = 'f32[40,128]{1,0:T(8,128)}', space=vmem, size = 0x5000, scoped, tag = 'scratch operand']
  #allocation3 [shape = 'f32[40,128]{1,0:T(8,128)}', space=vmem, size = 0x5000, scoped, tag = 'scratch operand']
  #allocation4 [shape = 'f32[16,128]{1,0:T(8,128)}', space=vmem, size = 0x2000, scoped, tag = 'scratch operand']
  %s0 = inlined_call_operand.vmem [shape: f32[2,16,128], index: 0, kind: input, shape index: {}]
  %s1 = inlined_call_operand.vmem [shape: f32[2,16,128], index: 1, kind: input, shape index: {}]
  %s2 = inlined_call_operand.vmem [shape: f32[40,16], index: 2, kind: input, shape index: {}]
  %s3 = inlined_call_operand.vmem [shape: f32[40,1], index: 3, kind: input, shape index: {}]
  %s4 = inlined_call_operand.vmem [shape: f32[16,16], index: 4, kind: input, shape index: {}]
  %s5 = inlined_call_operand.vmem [shape: f32[16,1], index: 5, kind: input, shape index: {}]
  %s6 = inlined_call_operand.hbm [shape: f32[2,2,128], index: 6, kind: output, shape index: {}]
  %s7 = sld [smem:[#allocation0]]
  $region61: #{tpu_custom_call.1} parent=0
    _
  %s9 = ssub.s32 1, %s7
  %s10 = scalar_select 0, %s9, %s7
  $region1: #{tpu_custom_call.1} parent=0
    #allocation5 [shape = 'u8[2048]{0}', space=vmem, size = 0x800, scoped, tag = 'output window, operand 0']
    #allocation6 [shape = 's32[2]{0}', space=sflag, size = 0x8, scoped, tag = 'scoped memory for tpu_custom_call.1']
    %11 = vsyncpa [#allocation6], 0
    %s12 = scalar_lea.sflag [#allocation6], 1
    %13 = vsyncpa %s12, 0
    loop: start=0, step=1, limit=4
    $region2: #{tpu_custom_call.1} parent=1 // loop_pre_header
      _
    $region3: #{tpu_custom_call.1} parent=1 // loop_header
      %s15 = sphi 0, %s19
      %p16 = scmp.ge.s32.totalorder %s15, 4
      %s22 = sphi 0, %s34
      %s23 = sphi 0, %s30
      %s24 = sphi 0, %s22
      %s25 = sphi 0, %s23
      %s26 = sphi 0, %s24
      %s27 = sphi 0, %s25
      %s37 = sphi 0, %s39
      %s40 = sphi 0, %s37
      %s41 = sphi 0, %s40
      %s57 = sphi 0, %s41
      %s63 = sphi 0, %s65
      %s66 = sphi 0, %s63
      %s67 = sphi 0, %s66
      %s83 = sphi 0, %s67
      %s87 = sphi 0, %s87
      %s89 = sphi 0, %s87
      %s90 = sphi 0, %s89
      %s104 = sphi 0, %s90
      %s108 = sphi 0, %s108
      %s110 = sphi 0, %s108
      %s111 = sphi 0, %s110
      %s125 = sphi 0, %s111
      %s129 = sphi 0, %s129
      %s131 = sphi 0, %s129
      %s132 = sphi 0, %s131
      %s146 = sphi 0, %s132
      %s150 = sphi 0, %s150
      %s152 = sphi 0, %s150
      %s153 = sphi 0, %s152
      %s167 = sphi 0, %s153
      %s175 = sphi 0, %s177
      %s178 = sphi 0, %s175
      %s179 = sphi 0, %s178
      %s195 = sphi 0, %s179
    $region4: #{tpu_custom_call.1} parent=1 // loop_header_branch
      %18 = sbr.rel (%p16) target = $region8
    $region5: #{tpu_custom_call.1} parent=1 // loop_body
      %s20 = ssub.s32 %s15, 1
      %s21 = ssub.s32 %s15, 2
      %s28 = sadd.s32 1, %s23
      %p29 = scmp.ge.s32.totalorder %s28, 1
      %s30 = scalar_select %p29, 0, %s28
      %s31 = sadd.s32 1, %s22
      %s32 = scalar_select %p29, %s31, %s22
      %p33 = scmp.ge.s32.totalorder %s32, 2
      %s34 = scalar_select %p33, 0, %s32
      %s35 = ssub.s32 %s22, %s34
      %p36 = scmp.eq.s32.totalorder %s35, 0
      %s38 = sadd.s32 %s37, 1
      %s39 = scalar_select %p36, %s37, %s38
      %p42 = pneg %p36
      %p43 = scmp.eq.s32.totalorder %s15, 1
      %p44 = por %p42, %p43
      %p45 = scmp.ne.s32.totalorder %s37, %s40
      %p46 = scmp.eq.s32.totalorder %s15, 0
      %p47 = por %p45, %p46
      %p48 = scmp.ne.s32.totalorder %s37, %s40
      %p49 = scmp.eq.s32.totalorder %s20, 1
      %p50 = por %p48, %p49
      %p51 = scmp.ne.s32.totalorder %s40, %s41
      %p52 = scmp.eq.s32.totalorder %s20, 0
      %p53 = por %p51, %p52
      %p54 = scmp.ne.s32.totalorder %s40, %s41
      %p55 = scmp.eq.s32.totalorder %s21, 1
      %p56 = por %p54, %p55
      %p58 = scmp.ne.s32.totalorder %s41, %s57
      %p59 = scmp.eq.s32.totalorder %s21, 0
      %p60 = por %p58, %p59
      %s61 = ssub.s32 %s22, %s34
      %p62 = scmp.eq.s32.totalorder %s61, 0
      %s64 = sadd.s32 %s63, 1
      %s65 = scalar_select %p62, %s63, %s64
      %p68 = pneg %p62
      %p69 = scmp.eq.s32.totalorder %s15, 1
      %p70 = por %p68, %p69
      %p71 = scmp.ne.s32.totalorder %s63, %s66
      %p72 = scmp.eq.s32.totalorder %s15, 0
      %p73 = por %p71, %p72
      %p74 = scmp.ne.s32.totalorder %s63, %s66
      %p75 = scmp.eq.s32.totalorder %s20, 1
      %p76 = por %p74, %p75
      %p77 = scmp.ne.s32.totalorder %s66, %s67
      %p78 = scmp.eq.s32.totalorder %s20, 0
      %p79 = por %p77, %p78
      %p80 = scmp.ne.s32.totalorder %s66, %s67
      %p81 = scmp.eq.s32.totalorder %s21, 1
      %p82 = por %p80, %p81
      %p84 = scmp.ne.s32.totalorder %s67, %s83
      %p85 = scmp.eq.s32.totalorder %s21, 0
      %p86 = por %p84, %p85
      %s88 = sadd.s32 %s87, 1
      %p91 = scmp.eq.s32.totalorder %s15, 1
      %p92 = scmp.ne.s32.totalorder %s87, %s89
      %p93 = scmp.eq.s32.totalorder %s15, 0
      %p94 = por %p92, %p93
      %p95 = scmp.ne.s32.totalorder %s87, %s89
      %p96 = scmp.eq.s32.totalorder %s20, 1
      %p97 = por %p95, %p96
      %p98 = scmp.ne.s32.totalorder %s89, %s90
      %p99 = scmp.eq.s32.totalorder %s20, 0
      %p100 = por %p98, %p99
      %p101 = scmp.ne.s32.totalorder %s89, %s90
      %p102 = scmp.eq.s32.totalorder %s21, 1
      %p103 = por %p101, %p102
      %p105 = scmp.ne.s32.totalorder %s90, %s104
      %p106 = scmp.eq.s32.totalorder %s21, 0
      %p107 = por %p105, %p106
      %s109 = sadd.s32 %s108, 1
      %p112 = scmp.eq.s32.totalorder %s15, 1
      %p113 = scmp.ne.s32.totalorder %s108, %s110
      %p114 = scmp.eq.s32.totalorder %s15, 0
      %p115 = por %p113, %p114
      %p116 = scmp.ne.s32.totalorder %s108, %s110
      %p117 = scmp.eq.s32.totalorder %s20, 1
      %p118 = por %p116, %p117
      %p119 = scmp.ne.s32.totalorder %s110, %s111
      %p120 = scmp.eq.s32.totalorder %s20, 0
      %p121 = por %p119, %p120
      %p122 = scmp.ne.s32.totalorder %s110, %s111
      %p123 = scmp.eq.s32.totalorder %s21, 1
      %p124 = por %p122, %p123
      %p126 = scmp.ne.s32.totalorder %s111, %s125
      %p127 = scmp.eq.s32.totalorder %s21, 0
      %p128 = por %p126, %p127
      %s130 = sadd.s32 %s129, 1
      %p133 = scmp.eq.s32.totalorder %s15, 1
      %p134 = scmp.ne.s32.totalorder %s129, %s131
      %p135 = scmp.eq.s32.totalorder %s15, 0
      %p136 = por %p134, %p135
      %p137 = scmp.ne.s32.totalorder %s129, %s131
      %p138 = scmp.eq.s32.totalorder %s20, 1
      %p139 = por %p137, %p138
      %p140 = scmp.ne.s32.totalorder %s131, %s132
      %p141 = scmp.eq.s32.totalorder %s20, 0
      %p142 = por %p140, %p141
      %p143 = scmp.ne.s32.totalorder %s131, %s132
      %p144 = scmp.eq.s32.totalorder %s21, 1
      %p145 = por %p143, %p144
      %p147 = scmp.ne.s32.totalorder %s132, %s146
      %p148 = scmp.eq.s32.totalorder %s21, 0
      %p149 = por %p147, %p148
      %s151 = sadd.s32 %s150, 1
      %p154 = scmp.eq.s32.totalorder %s15, 1
      %p155 = scmp.ne.s32.totalorder %s150, %s152
      %p156 = scmp.eq.s32.totalorder %s15, 0
      %p157 = por %p155, %p156
      %p158 = scmp.ne.s32.totalorder %s150, %s152
      %p159 = scmp.eq.s32.totalorder %s20, 1
      %p160 = por %p158, %p159
      %p161 = scmp.ne.s32.totalorder %s152, %s153
      %p162 = scmp.eq.s32.totalorder %s20, 0
      %p163 = por %p161, %p162
      %p164 = scmp.ne.s32.totalorder %s152, %s153
      %p165 = scmp.eq.s32.totalorder %s21, 1
      %p166 = por %p164, %p165
      %p168 = scmp.ne.s32.totalorder %s153, %s167
      %p169 = scmp.eq.s32.totalorder %s21, 0
      %p170 = por %p168, %p169
      %s171 = ssub.s32 %s22, %s34
      %s172 = ssub.s32 %s23, %s30
      %s173 = sor.u32 %s171, %s172
      %p174 = scmp.eq.s32.totalorder %s173, 0
      %s176 = sadd.s32 %s175, 1
      %s177 = scalar_select %p174, %s175, %s176
      %p180 = pneg %p174
      %p181 = scmp.eq.s32.totalorder %s15, 1
      %p182 = por %p180, %p181
      %p183 = scmp.ne.s32.totalorder %s175, %s178
      %p184 = scmp.eq.s32.totalorder %s15, 0
      %p185 = por %p183, %p184
      %p186 = scmp.ne.s32.totalorder %s175, %s178
      %p187 = scmp.eq.s32.totalorder %s20, 1
      %p188 = por %p186, %p187
      %p189 = scmp.ne.s32.totalorder %s178, %s179
      %p190 = scmp.eq.s32.totalorder %s20, 0
      %p191 = por %p189, %p190
      %p192 = scmp.ne.s32.totalorder %s178, %s179
      %p193 = scmp.eq.s32.totalorder %s21, 1
      %p194 = por %p192, %p193
      %p196 = scmp.ne.s32.totalorder %s179, %s195
      %p197 = scmp.eq.s32.totalorder %s21, 0
      %p198 = por %p196, %p197
      %p199 = scmp.le.s32.totalorder 1, %s15
      %p200 = scmp.lt.s32.totalorder %s15, 3
      %p201 = pnand %p199, %p200
      %p202 = pneg %p201
      // Predicated region
      $region9: #{tpu_custom_call.1} parent=5 // pred_check
        _
      $region10: #{tpu_custom_call.1} parent=5 // pred_check_branch
        %204 = sbr.rel (%p201) target = $region12
      $region11: #{tpu_custom_call.1} parent=5 // pred_region
        %s205 = ssub.s32 %s15, 1
        // Predicated region
        $region13: #{tpu_custom_call.1} parent=11 // pred_check
          %p206 = pneg %p100
        $region14: #{tpu_custom_call.1} parent=11 // pred_check_branch
          %208 = sbr.rel (%p206) target = $region16
        $region15: #{tpu_custom_call.1} parent=11 // pred_region
          _
        $region16: #{tpu_custom_call.1} parent=11 // pred_fallthru
          _
        // Predicated region
        $region17: #{tpu_custom_call.1} parent=11 // pred_check
          %p209 = pneg %p121
        $region18: #{tpu_custom_call.1} parent=11 // pred_check_branch
          %211 = sbr.rel (%p209) target = $region20
        $region19: #{tpu_custom_call.1} parent=11 // pred_region
          _
        $region20: #{tpu_custom_call.1} parent=11 // pred_fallthru
          _
        // Predicated region
        $region21: #{tpu_custom_call.1} parent=11 // pred_check
          %p212 = pneg %p142
        $region22: #{tpu_custom_call.1} parent=11 // pred_check_branch
          %214 = sbr.rel (%p212) target = $region24
        $region23: #{tpu_custom_call.1} parent=11 // pred_region
          _
        $region24: #{tpu_custom_call.1} parent=11 // pred_fallthru
          _
        // Predicated region
        $region25: #{tpu_custom_call.1} parent=11 // pred_check
          %p215 = pneg %p163
        $region26: #{tpu_custom_call.1} parent=11 // pred_check_branch
          %217 = sbr.rel (%p215) target = $region28
        $region27: #{tpu_custom_call.1} parent=11 // pred_region
          _
        $region28: #{tpu_custom_call.1} parent=11 // pred_fallthru
          _
      $region12: #{tpu_custom_call.1} parent=5 // pred_fallthru
        _
      %p218 = scmp.lt.s32.totalorder %s15, 2
      // Predicated region
      $region29: #{tpu_custom_call.1} parent=5 // pred_check
        %p219 = pneg %p218
      $region30: #{tpu_custom_call.1} parent=5 // pred_check_branch
        %221 = sbr.rel (%p219) target = $region32
      $region31: #{tpu_custom_call.1} parent=5 // pred_region
        // Predicated region
        $region33: #{tpu_custom_call.1} parent=31 // pred_check
          %p222 = pneg %p47
        $region34: #{tpu_custom_call.1} parent=31 // pred_check_branch
          %224 = sbr.rel (%p222) target = $region36
        $region35: #{tpu_custom_call.1} parent=31 // pred_region
          %p225 = scmp.lt.s32.totalorder %s22, 1
          %s226 = scalar_select %p225, %s22, 1
          %s227 = smul.addr %s226, 2
          %s228 = smul.addr %s227, 8
          %s229 = scalar_lea.vmem %s0, %s228
        $region36: #{tpu_custom_call.1} parent=31 // pred_fallthru
          _
        // Predicated region
        $region37: #{tpu_custom_call.1} parent=31 // pred_check
          %p230 = pneg %p73
        $region38: #{tpu_custom_call.1} parent=31 // pred_check_branch
          %232 = sbr.rel (%p230) target = $region40
        $region39: #{tpu_custom_call.1} parent=31 // pred_region
          %p233 = scmp.lt.s32.totalorder %s22, 1
          %s234 = scalar_select %p233, %s22, 1
          %s235 = smul.addr %s234, 2
          %s236 = smul.addr %s235, 8
          %s237 = scalar_lea.vmem %s1, %s236
        $region40: #{tpu_custom_call.1} parent=31 // pred_fallthru
          _
      $region32: #{tpu_custom_call.1} parent=5 // pred_fallthru
        _
      %p238 = scmp.le.s32.totalorder 1, %s15
      %p239 = scmp.lt.s32.totalorder %s15, 3
      %p240 = pnand %p238, %p239
      %p241 = pneg %p240
      // Predicated region
      $region41: #{tpu_custom_call.1} parent=5 // pred_check
        _
      $region42: #{tpu_custom_call.1} parent=5 // pred_check_branch
        %243 = sbr.rel (%p240) target = $region44
      $region43: #{tpu_custom_call.1} parent=5 // pred_region
        %s244 = ssub.s32 %s15, 1
        %p245 = scmp.lt.s32.totalorder %s24, 1
        %s246 = scalar_select %p245, %s24, 1
        %s247 = smul.addr %s246, 2
        %s248 = smul.addr %s247, 8
        %s249 = scalar_lea.vmem %s0, %s248
        %p250 = pneg %p53
        %p251 = pneg %p50
        %p252 = scmp.lt.s32.totalorder %s24, 1
        %s253 = scalar_select %p252, %s24, 1
        %s254 = smul.addr %s253, 2
        %s255 = smul.addr %s254, 8
        %s256 = scalar_lea.vmem %s1, %s255
        %p257 = pneg %p79
        %p258 = pneg %p76
        %p259 = pneg %p100
        %p260 = pneg %p97
        %p261 = pneg %p121
        %p262 = pneg %p118
        %p263 = pneg %p142
        %p264 = pneg %p139
        %p265 = pneg %p163
        %p266 = pneg %p160
        %p267 = pneg %p191
        %p268 = pneg %p188
        %s269 = sand.u32 %s178, 1
        %s270 = scalar_lea.sflag [#allocation6], %s269
        %s271 = sand.u32 %s178, 1
        %s272 = smul.addr %s271, 2
        %s273 = scalar_lea.vmem [#allocation5], %s272
        %p274 = scmp.lt.s32.totalorder %s24, 1
        %s275 = scalar_select %p274, %s24, 1
        %s276 = smul.addr %s275, 2
        %s277 = smul.addr %s276, 8
        %s278 = scalar_lea.vmem %s0, %s277
        %p279 = scmp.lt.s32.totalorder %s24, 1
        %s280 = scalar_select %p279, %s24, 1
        %s281 = smul.addr %s280, 2
        %s282 = smul.addr %s281, 8
        %s283 = scalar_lea.vmem %s1, %s282
        %p284 = scmp.eq.s32.totalorder %s25, 0
        // Predicated region
        $region45: #{tpu_custom_call.1} parent=43 // pred_check
          %p285 = pneg %p284
        $region46: #{tpu_custom_call.1} parent=43 // pred_check_branch
          %287 = sbr.rel (%p285) target = $region48
        $region47: #{tpu_custom_call.1} parent=43 // pred_region
          %v288 = vld [vmem:[%s2] sm:$0xff]
          %v289 = vld [vmem:[%s2 + $0x8] sm:$0xff]
          %v290 = vld [vmem:[%s2 + $0x10] sm:$0xff]
          %v291 = vld [vmem:[%s2 + $0x18] sm:$0xff]
          %v292 = vld [vmem:[%s2 + $0x20] sm:$0xff]
          %v293 = vld [vmem:[%s3] sm:$0xff]
          %v294 = vld [vmem:[%s3 + $0x8] sm:$0xff]
          %v295 = vld [vmem:[%s3 + $0x10] sm:$0xff]
          %v296 = vld [vmem:[%s3 + $0x18] sm:$0xff]
          %v297 = vld [vmem:[%s3 + $0x20] sm:$0xff]
          %v298 = vld [vmem:[%s278] sm:$0xff]
          %v299 = vld [vmem:[%s278 + $0x8] sm:$0xff]
          %v300 = vld [vmem:[%s283] sm:$0xff]
          %v301 = vld [vmem:[%s283 + $0x8] sm:$0xff]
          %303 = vset.pattern.permute.xlu0 0
          %304 = vperm.xlu0 %303, %v293
          %v305 = vpop.permute.xlu0 %304
          %308 = vset.pattern.permute.xlu0 0
          %309 = vperm.xlu0 %308, %v294
          %v310 = vpop.permute.xlu0 %309
          %313 = vset.pattern.permute.xlu0 0
          %314 = vperm.xlu0 %313, %v295
          %v315 = vpop.permute.xlu0 %314
          %318 = vset.pattern.permute.xlu0 0
          %319 = vperm.xlu0 %318, %v296
          %v320 = vpop.permute.xlu0 %319
          %323 = vset.pattern.permute.xlu0 0
          %324 = vperm.xlu0 %323, %v297
          %v325 = vpop.permute.xlu0 %324
          %vm327 = vcmask 130048
          %v329 = vsel %vm327, %v288, 0
          %v332 = vsel %vm327, %v289, 0
          %v335 = vsel %vm327, %v290, 0
          %v338 = vsel %vm327, %v291, 0
          %v341 = vsel %vm327, %v292, 0
          %343 = vmatprep.subr.mxu0 0.0
          %344 = vmatpush1.msra.mxu0 0.0
          %345 = vmatprep.subr.mxu0 0.0
          %346 = vmatpush1.msra.mxu0 0.0
          %347 = vmatprep.subr.mxu0 0.0
          %348 = vmatpush1.msra.mxu0 0.0
          %349 = vmatprep.subr.mxu0 0.0
          %350 = vmatpush1.msra.mxu0 0.0
          %351 = vmatprep.subr.mxu0 0.0
          %352 = vmatpush1.msra.mxu0 0.0
          %353 = vmatprep.subr.mxu0 0.0
          %354 = vmatpush1.msra.mxu0 0.0
          %355 = vmatprep.subr.mxu0 0.0
          %356 = vmatpush1.msra.mxu0 0.0
          %357 = vmatprep.subr.mxu0 0.0
          %358 = vmatpush1.msra.mxu0 0.0
          %359 = vmatprep.subr.mxu0 0.0
          %360 = vmatpush1.msra.mxu0 0.0
          %361 = vmatprep.subr.mxu0 0.0
          %362 = vmatpush1.msra.mxu0 0.0
          %363 = vmatprep.subr.mxu0 0.0
          %364 = vmatpush1.msra.mxu0 0.0
          %365 = vmatprep.subr.mxu0 0.0
          %366 = vmatpush1.msra.mxu0 0.0
          %367 = vmatprep.subr.mxu0 0.0
          %368 = vmatpush1.msra.mxu0 0.0
          %369 = vmatprep.subr.mxu0 0.0
          %370 = vmatpush1.msra.mxu0 0.0
          %371 = vmatprep.subr.mxu0 0.0
          %372 = vmatpush1.msra.mxu0 %v299
          %373 = vmatprep.subr.mxu0 0.0
          %374 = vmatpush1.msra.mxu0 %v298
          %375 = vmatprep.subr.mxu0 0.0
          %376 = vmatpush2.msra.mxu0 0.0
          %377 = vmatprep.subr.mxu0 0.0
          %378 = vmatpush2.msra.mxu0 0.0
          %379 = vmatprep.subr.mxu0 0.0
          %380 = vmatpush2.msra.mxu0 0.0
          %381 = vmatprep.subr.mxu0 0.0
          %382 = vmatpush2.msra.mxu0 0.0
          %383 = vmatprep.subr.mxu0 0.0
          %384 = vmatpush2.msra.mxu0 0.0
          %385 = vmatprep.subr.mxu0 0.0
          %386 = vmatpush2.msra.mxu0 0.0
          %387 = vmatprep.subr.mxu0 0.0
          %388 = vmatpush2.msra.mxu0 0.0
          %389 = vmatprep.subr.mxu0 0.0
          %390 = vmatpush2.msra.mxu0 0.0
          %391 = vmatprep.subr.mxu0 0.0
          %392 = vmatpush2.msra.mxu0 0.0
          %393 = vmatprep.subr.mxu0 0.0
          %394 = vmatpush2.msra.mxu0 0.0
          %395 = vmatprep.subr.mxu0 0.0
          %396 = vmatpush2.msra.mxu0 0.0
          %397 = vmatprep.subr.mxu0 0.0
          %398 = vmatpush2.msra.mxu0 0.0
          %399 = vmatprep.subr.mxu0 0.0
          %400 = vmatpush2.msra.mxu0 0.0
          %401 = vmatprep.subr.mxu0 0.0
          %402 = vmatpush2.msra.mxu0 0.0
          %403 = vmatprep.subr.mxu0 0.0
          %404 = vmatpush2.msra.mxu0 0.0
          %405 = vmatprep.subr.mxu0 0.0
          %406 = vmatpush2.msra.mxu0 0.0
          %407 = vmatprep.mubr.f32.mxu0 0.0
          %408 = vmatmul.mubr.f32.gmra.mxu0 %v329
          %v409 = vpop.f32.mrf.mxu0
          %v410 = vadd.f32 %v305, %v409
          %v411 = vpop.f32.mrf.mxu0
          %412 = vmatprep.mubr.f32.mxu0 0.0
          %413 = vmatmul.mubr.f32.gmra.mxu0 %v332
          %v414 = vpop.f32.mrf.mxu0
          %v415 = vadd.f32 %v310, %v414
          %v416 = vpop.f32.mrf.mxu0
          %417 = vmatprep.mubr.f32.mxu0 0.0
          %418 = vmatmul.mubr.f32.gmra.mxu0 %v335
          %v419 = vpop.f32.mrf.mxu0
          %v420 = vadd.f32 %v315, %v419
          %v421 = vpop.f32.mrf.mxu0
          %422 = vmatprep.mubr.f32.mxu0 0.0
          %423 = vmatmul.mubr.f32.gmra.mxu0 %v338
          %v424 = vpop.f32.mrf.mxu0
          %v425 = vadd.f32 %v320, %v424
          %v426 = vpop.f32.mrf.mxu0
          %427 = vmatprep.mubr.f32.mxu0 0.0
          %428 = vmatmul.mubr.f32.gmra.mxu0 %v341
          %v429 = vpop.f32.mrf.mxu0
          %v430 = vadd.f32 %v325, %v429
          %v431 = vpop.f32.mrf.mxu0
          %432 = vdwg.mxu0
          %v433 = vlaneseq
          %v434 = vand.u32 %v433, 127
          %vm435 = vcmp.lt.s32.totalorder %v434, 64
          %v436 = vsel %vm435, %v410, 0.0
          %v437 = vsel %vm435, %v415, 0.0
          %v438 = vsel %vm435, %v420, 0.0
          %v439 = vsel %vm435, %v425, 0.0
          %v440 = vsel %vm435, %v430, 0.0
          %441 = vst [vmem:[#allocation2] sm:$0xff] %v436
          %442 = vst [vmem:[#allocation2 + $0x8] sm:$0xff] %v437
          %443 = vst [vmem:[#allocation2 + $0x10] sm:$0xff] %v438
          %444 = vst [vmem:[#allocation2 + $0x18] sm:$0xff] %v439
          %445 = vst [vmem:[#allocation2 + $0x20] sm:$0xff] %v440
          %446 = vmatprep.subr.mxu0 0.0
          %447 = vmatpush1.msra.mxu0 0.0
          %448 = vmatprep.subr.mxu0 0.0
          %449 = vmatpush1.msra.mxu0 0.0
          %450 = vmatprep.subr.mxu0 0.0
          %451 = vmatpush1.msra.mxu0 0.0
          %452 = vmatprep.subr.mxu0 0.0
          %453 = vmatpush1.msra.mxu0 0.0
          %454 = vmatprep.subr.mxu0 0.0
          %455 = vmatpush1.msra.mxu0 0.0
          %456 = vmatprep.subr.mxu0 0.0
          %457 = vmatpush1.msra.mxu0 0.0
          %458 = vmatprep.subr.mxu0 0.0
          %459 = vmatpush1.msra.mxu0 0.0
          %460 = vmatprep.subr.mxu0 0.0
          %461 = vmatpush1.msra.mxu0 0.0
          %462 = vmatprep.subr.mxu0 0.0
          %463 = vmatpush1.msra.mxu0 0.0
          %464 = vmatprep.subr.mxu0 0.0
          %465 = vmatpush1.msra.mxu0 0.0
          %466 = vmatprep.subr.mxu0 0.0
          %467 = vmatpush1.msra.mxu0 0.0
          %468 = vmatprep.subr.mxu0 0.0
          %469 = vmatpush1.msra.mxu0 0.0
          %470 = vmatprep.subr.mxu0 0.0
          %471 = vmatpush1.msra.mxu0 0.0
          %472 = vmatprep.subr.mxu0 0.0
          %473 = vmatpush1.msra.mxu0 0.0
          %474 = vmatprep.subr.mxu0 0.0
          %475 = vmatpush1.msra.mxu0 %v301
          %476 = vmatprep.subr.mxu0 0.0
          %477 = vmatpush1.msra.mxu0 %v300
          %478 = vmatprep.subr.mxu0 0.0
          %479 = vmatpush2.msra.mxu0 0.0
          %480 = vmatprep.subr.mxu0 0.0
          %481 = vmatpush2.msra.mxu0 0.0
          %482 = vmatprep.subr.mxu0 0.0
          %483 = vmatpush2.msra.mxu0 0.0
          %484 = vmatprep.subr.mxu0 0.0
          %485 = vmatpush2.msra.mxu0 0.0
          %486 = vmatprep.subr.mxu0 0.0
          %487 = vmatpush2.msra.mxu0 0.0
          %488 = vmatprep.subr.mxu0 0.0
          %489 = vmatpush2.msra.mxu0 0.0
          %490 = vmatprep.subr.mxu0 0.0
          %491 = vmatpush2.msra.mxu0 0.0
          %492 = vmatprep.subr.mxu0 0.0
          %493 = vmatpush2.msra.mxu0 0.0
          %494 = vmatprep.subr.mxu0 0.0
          %495 = vmatpush2.msra.mxu0 0.0
          %496 = vmatprep.subr.mxu0 0.0
          %497 = vmatpush2.msra.mxu0 0.0
          %498 = vmatprep.subr.mxu0 0.0
          %499 = vmatpush2.msra.mxu0 0.0
          %500 = vmatprep.subr.mxu0 0.0
          %501 = vmatpush2.msra.mxu0 0.0
          %502 = vmatprep.subr.mxu0 0.0
          %503 = vmatpush2.msra.mxu0 0.0
          %504 = vmatprep.subr.mxu0 0.0
          %505 = vmatpush2.msra.mxu0 0.0
          %506 = vmatprep.subr.mxu0 0.0
          %507 = vmatpush2.msra.mxu0 0.0
          %508 = vmatprep.subr.mxu0 0.0
          %509 = vmatpush2.msra.mxu0 0.0
          %510 = vmatprep.mubr.f32.mxu0 0.0
          %511 = vmatmul.mubr.f32.gmra.mxu0 %v329
          %v512 = vpop.f32.mrf.mxu0
          %v513 = vadd.f32 %v305, %v512
          %v514 = vpop.f32.mrf.mxu0
          %515 = vmatprep.mubr.f32.mxu0 0.0
          %516 = vmatmul.mubr.f32.gmra.mxu0 %v332
          %v517 = vpop.f32.mrf.mxu0
          %v518 = vadd.f32 %v310, %v517
          %v519 = vpop.f32.mrf.mxu0
          %520 = vmatprep.mubr.f32.mxu0 0.0
          %521 = vmatmul.mubr.f32.gmra.mxu0 %v335
          %v522 = vpop.f32.mrf.mxu0
          %v523 = vadd.f32 %v315, %v522
          %v524 = vpop.f32.mrf.mxu0
          %525 = vmatprep.mubr.f32.mxu0 0.0
          %526 = vmatmul.mubr.f32.gmra.mxu0 %v338
          %v527 = vpop.f32.mrf.mxu0
          %v528 = vadd.f32 %v320, %v527
          %v529 = vpop.f32.mrf.mxu0
          %530 = vmatprep.mubr.f32.mxu0 0.0
          %531 = vmatmul.mubr.f32.gmra.mxu0 %v341
          %v532 = vpop.f32.mrf.mxu0
          %v533 = vadd.f32 %v325, %v532
          %v534 = vpop.f32.mrf.mxu0
          %535 = vdwg.mxu0
          %v536 = vsel %vm435, %v513, 0.0
          %v537 = vsel %vm435, %v518, 0.0
          %v538 = vsel %vm435, %v523, 0.0
          %v539 = vsel %vm435, %v528, 0.0
          %v540 = vsel %vm435, %v533, 0.0
          %541 = vst [vmem:[#allocation3] sm:$0xff] %v536
          %542 = vst [vmem:[#allocation3 + $0x8] sm:$0xff] %v537
          %543 = vst [vmem:[#allocation3 + $0x10] sm:$0xff] %v538
          %544 = vst [vmem:[#allocation3 + $0x18] sm:$0xff] %v539
          %545 = vst [vmem:[#allocation3 + $0x20] sm:$0xff] %v540
          %v546 = vld [vmem:[%s4] sm:$0xff]
          %v547 = vld [vmem:[%s4 + $0x8] sm:$0xff]
          %v548 = vld [vmem:[%s5] sm:$0xff]
          %v549 = vld [vmem:[%s5 + $0x8] sm:$0xff]
          %551 = vset.pattern.permute.xlu0 0
          %552 = vperm.xlu0 %551, %v548
          %v553 = vpop.permute.xlu0 %552
          %556 = vset.pattern.permute.xlu0 0
          %557 = vperm.xlu0 %556, %v549
          %v558 = vpop.permute.xlu0 %557
          %v561 = vsel %vm327, %v546, 0
          %v564 = vsel %vm327, %v547, 0
          %566 = vmatprep.subr.mxu0 0.0
          %567 = vmatpush1.msra.mxu0 0.0
          %568 = vmatprep.subr.mxu0 0.0
          %569 = vmatpush1.msra.mxu0 0.0
          %570 = vmatprep.subr.mxu0 0.0
          %571 = vmatpush1.msra.mxu0 0.0
          %572 = vmatprep.subr.mxu0 0.0
          %573 = vmatpush1.msra.mxu0 0.0
          %574 = vmatprep.subr.mxu0 0.0
          %575 = vmatpush1.msra.mxu0 0.0
          %576 = vmatprep.subr.mxu0 0.0
          %577 = vmatpush1.msra.mxu0 0.0
          %578 = vmatprep.subr.mxu0 0.0
          %579 = vmatpush1.msra.mxu0 0.0
          %580 = vmatprep.subr.mxu0 0.0
          %581 = vmatpush1.msra.mxu0 0.0
          %582 = vmatprep.subr.mxu0 0.0
          %583 = vmatpush1.msra.mxu0 0.0
          %584 = vmatprep.subr.mxu0 0.0
          %585 = vmatpush1.msra.mxu0 0.0
          %586 = vmatprep.subr.mxu0 0.0
          %587 = vmatpush1.msra.mxu0 0.0
          %588 = vmatprep.subr.mxu0 0.0
          %589 = vmatpush1.msra.mxu0 0.0
          %590 = vmatprep.subr.mxu0 0.0
          %591 = vmatpush1.msra.mxu0 0.0
          %592 = vmatprep.subr.mxu0 0.0
          %593 = vmatpush1.msra.mxu0 0.0
          %594 = vmatprep.subr.mxu0 0.0
          %595 = vmatpush1.msra.mxu0 %v299
          %596 = vmatprep.subr.mxu0 0.0
          %597 = vmatpush1.msra.mxu0 %v298
          %598 = vmatprep.subr.mxu0 0.0
          %599 = vmatpush2.msra.mxu0 0.0
          %600 = vmatprep.subr.mxu0 0.0
          %601 = vmatpush2.msra.mxu0 0.0
          %602 = vmatprep.subr.mxu0 0.0
          %603 = vmatpush2.msra.mxu0 0.0
          %604 = vmatprep.subr.mxu0 0.0
          %605 = vmatpush2.msra.mxu0 0.0
          %606 = vmatprep.subr.mxu0 0.0
          %607 = vmatpush2.msra.mxu0 0.0
          %608 = vmatprep.subr.mxu0 0.0
          %609 = vmatpush2.msra.mxu0 0.0
          %610 = vmatprep.subr.mxu0 0.0
          %611 = vmatpush2.msra.mxu0 0.0
          %612 = vmatprep.subr.mxu0 0.0
          %613 = vmatpush2.msra.mxu0 0.0
          %614 = vmatprep.subr.mxu0 0.0
          %615 = vmatpush2.msra.mxu0 0.0
          %616 = vmatprep.subr.mxu0 0.0
          %617 = vmatpush2.msra.mxu0 0.0
          %618 = vmatprep.subr.mxu0 0.0
          %619 = vmatpush2.msra.mxu0 0.0
          %620 = vmatprep.subr.mxu0 0.0
          %621 = vmatpush2.msra.mxu0 0.0
          %622 = vmatprep.subr.mxu0 0.0
          %623 = vmatpush2.msra.mxu0 0.0
          %624 = vmatprep.subr.mxu0 0.0
          %625 = vmatpush2.msra.mxu0 0.0
          %626 = vmatprep.subr.mxu0 0.0
          %627 = vmatpush2.msra.mxu0 0.0
          %628 = vmatprep.subr.mxu0 0.0
          %629 = vmatpush2.msra.mxu0 0.0
          %630 = vmatprep.mubr.f32.mxu0 0.0
          %631 = vmatmul.mubr.f32.gmra.mxu0 %v561
          %v632 = vpop.f32.mrf.mxu0
          %v633 = vadd.f32 %v553, %v632
          %v634 = vpop.f32.mrf.mxu0
          %635 = vmatprep.mubr.f32.mxu0 0.0
          %636 = vmatmul.mubr.f32.gmra.mxu0 %v564
          %v637 = vpop.f32.mrf.mxu0
          %v638 = vadd.f32 %v558, %v637
          %v639 = vpop.f32.mrf.mxu0
          %640 = vdwg.mxu0
          %641 = vst [vmem:[#allocation4] sm:$0xff] %v633
          %642 = vst [vmem:[#allocation4 + $0x8] sm:$0xff] %v638
        $region48: #{tpu_custom_call.1} parent=43 // pred_fallthru
          _
        %s643 = smul.u32 %s25, 128
        %s644 = sshra.s32 %s643, 7
        %s645 = sand.u32 %s643, 127
        %s646 = scalar_lea.vmem [#allocation4], %s644
        %v647 = vld [vmem:[%s646] sm:$0xff]
        %v648 = vld [vmem:[%s646 + $0x8] sm:$0xff]
        %s649 = scalar_lea.vmem [#allocation2], %s644
        %v650 = vld [vmem:[%s649] sm:$0xff]
        %v651 = vld [vmem:[#allocation2 + $0x8] sm:$0xff]
        %v652 = vld [vmem:[#allocation3 + $0x10] sm:$0xff]
        %v653 = vld [vmem:[#allocation3 + $0x18] sm:$0xff]
        %v654 = vld [vmem:[#allocation3 + $0x20] sm:$0xff]
        %655 = vxpose.xlu0.b32.start [1/16] %v650, 128
        %656 = vxpose.xlu0.b32.cont [2/16] 0.0, 128
        %657 = vxpose.xlu0.b32.cont [3/16] 0.0, 128
        %658 = vxpose.xlu0.b32.cont [4/16] 0.0, 128
        %659 = vxpose.xlu0.b32.cont [5/16] 0.0, 128
        %660 = vxpose.xlu0.b32.cont [6/16] 0.0, 128
        %661 = vxpose.xlu0.b32.cont [7/16] 0.0, 128
        %662 = vxpose.xlu0.b32.cont [8/16] 0.0, 128
        %663 = vxpose.xlu0.b32.cont [9/16] 0.0, 128
        %664 = vxpose.xlu0.b32.cont [10/16] 0.0, 128
        %665 = vxpose.xlu0.b32.cont [11/16] 0.0, 128
        %666 = vxpose.xlu0.b32.cont [12/16] 0.0, 128
        %667 = vxpose.xlu0.b32.cont [13/16] 0.0, 128
        %668 = vxpose.xlu0.b32.cont [14/16] 0.0, 128
        %669 = vxpose.xlu0.b32.cont [15/16] 0.0, 128
        %670 = vxpose.xlu0.b32.end [16/16] 0.0, 128
        %v671 = vpop.trf.xlu0
        %v672 = vpop.trf.xlu0
        %v673 = vpop.trf.xlu0
        %v674 = vpop.trf.xlu0
        %v675 = vpop.trf.xlu0
        %v676 = vpop.trf.xlu0
        %v677 = vpop.trf.xlu0
        %v678 = vpop.trf.xlu0
        %v679 = vpop.trf.xlu0
        %v680 = vpop.trf.xlu0
        %v681 = vpop.trf.xlu0
        %v682 = vpop.trf.xlu0
        %v683 = vpop.trf.xlu0
        %v684 = vpop.trf.xlu0
        %v685 = vpop.trf.xlu0
        %v686 = vpop.trf.xlu0
        %vm687 = vcmask 64512
        %v689 = vsel %vm687, %v671, 0
        %v692 = vsel %vm687, %v672, 0
        %v695 = vsel %vm687, %v673, 0
        %v698 = vsel %vm687, %v674, 0
        %v701 = vsel %vm687, %v675, 0
        %v704 = vsel %vm687, %v676, 0
        %v707 = vsel %vm687, %v677, 0
        %v710 = vsel %vm687, %v678, 0
        %v713 = vsel %vm687, %v679, 0
        %v716 = vsel %vm687, %v680, 0
        %v719 = vsel %vm687, %v681, 0
        %v722 = vsel %vm687, %v682, 0
        %v725 = vsel %vm687, %v683, 0
        %v728 = vsel %vm687, %v684, 0
        %v731 = vsel %vm687, %v685, 0
        %v734 = vsel %vm687, %v686, 0
        %736 = vmatprep.subr.mxu0 0.0
        %737 = vmatpush1.msra.mxu0 0.0
        %738 = vmatprep.subr.mxu0 0.0
        %739 = vmatpush1.msra.mxu0 0.0
        %740 = vmatprep.subr.mxu0 0.0
        %741 = vmatpush1.msra.mxu0 0.0
        %742 = vmatprep.subr.mxu0 0.0
        %743 = vmatpush1.msra.mxu0 0.0
        %744 = vmatprep.subr.mxu0 0.0
        %745 = vmatpush1.msra.mxu0 0.0
        %746 = vmatprep.subr.mxu0 0.0
        %747 = vmatpush1.msra.mxu0 0.0
        %748 = vmatprep.subr.mxu0 0.0
        %749 = vmatpush1.msra.mxu0 0.0
        %750 = vmatprep.subr.mxu0 0.0
        %751 = vmatpush1.msra.mxu0 0.0
        %752 = vmatprep.subr.mxu0 0.0
        %753 = vmatpush1.msra.mxu0 0.0
        %754 = vmatprep.subr.mxu0 0.0
        %755 = vmatpush1.msra.mxu0 0.0
        %756 = vmatprep.subr.mxu0 0.0
        %757 = vmatpush1.msra.mxu0 0.0
        %758 = vmatprep.subr.mxu0 0.0
        %759 = vmatpush1.msra.mxu0 0.0
        %760 = vmatprep.subr.mxu0 0.0
        %761 = vmatpush1.msra.mxu0 0.0
        %762 = vmatprep.subr.mxu0 0.0
        %763 = vmatpush1.msra.mxu0 0.0
        %764 = vmatprep.subr.mxu0 0.0
        %765 = vmatpush1.msra.mxu0 0.0
        %766 = vmatprep.subr.mxu0 0.0
        %767 = vmatpush1.msra.mxu0 %v651
        %768 = vmatprep.subr.mxu0 0.0
        %769 = vmatpush2.msra.mxu0 0.0
        %770 = vmatprep.subr.mxu0 0.0
        %771 = vmatpush2.msra.mxu0 0.0
        %772 = vmatprep.subr.mxu0 0.0
        %773 = vmatpush2.msra.mxu0 0.0
        %774 = vmatprep.subr.mxu0 0.0
        %775 = vmatpush2.msra.mxu0 0.0
        %776 = vmatprep.subr.mxu0 0.0
        %777 = vmatpush2.msra.mxu0 0.0
        %778 = vmatprep.subr.mxu0 0.0
        %779 = vmatpush2.msra.mxu0 0.0
        %780 = vmatprep.subr.mxu0 0.0
        %781 = vmatpush2.msra.mxu0 0.0
        %782 = vmatprep.subr.mxu0 0.0
        %783 = vmatpush2.msra.mxu0 0.0
        %784 = vmatprep.subr.mxu0 0.0
        %785 = vmatpush2.msra.mxu0 0.0
        %786 = vmatprep.subr.mxu0 0.0
        %787 = vmatpush2.msra.mxu0 0.0
        %788 = vmatprep.subr.mxu0 0.0
        %789 = vmatpush2.msra.mxu0 0.0
        %790 = vmatprep.subr.mxu0 0.0
        %791 = vmatpush2.msra.mxu0 0.0
        %792 = vmatprep.subr.mxu0 0.0
        %793 = vmatpush2.msra.mxu0 0.0
        %794 = vmatprep.subr.mxu0 0.0
        %795 = vmatpush2.msra.mxu0 0.0
        %796 = vmatprep.subr.mxu0 0.0
        %797 = vmatpush2.msra.mxu0 0.0
        %798 = vmatprep.subr.mxu0 0.0
        %799 = vmatpush2.msra.mxu0 0.0
        %800 = vmatprep.mubr.f32.mxu0 0.0
        %801 = vmatmul.mubr.f32.gmra.mxu0 %v689
        %v802 = vpop.f32.mrf.mxu0
        %v803 = vadd.f32 0.0, %v802
        %v804 = vpop.f32.mrf.mxu0
        %805 = vmatprep.mubr.f32.mxu0 0.0
        %806 = vmatmul.mubr.f32.gmra.mxu0 %v692
        %v807 = vpop.f32.mrf.mxu0
        %v808 = vadd.f32 0.0, %v807
        %v809 = vpop.f32.mrf.mxu0
        %810 = vmatprep.mubr.f32.mxu0 0.0
        %811 = vmatmul.mubr.f32.gmra.mxu0 %v695
        %v812 = vpop.f32.mrf.mxu0
        %v813 = vadd.f32 0.0, %v812
        %v814 = vpop.f32.mrf.mxu0
        %815 = vmatprep.mubr.f32.mxu0 0.0
        %816 = vmatmul.mubr.f32.gmra.mxu0 %v698
        %v817 = vpop.f32.mrf.mxu0
        %v818 = vadd.f32 0.0, %v817
        %v819 = vpop.f32.mrf.mxu0
        %820 = vmatprep.mubr.f32.mxu0 0.0
        %821 = vmatmul.mubr.f32.gmra.mxu0 %v701
        %v822 = vpop.f32.mrf.mxu0
        %v823 = vadd.f32 0.0, %v822
        %v824 = vpop.f32.mrf.mxu0
        %825 = vmatprep.mubr.f32.mxu0 0.0
        %826 = vmatmul.mubr.f32.gmra.mxu0 %v704
        %v827 = vpop.f32.mrf.mxu0
        %v828 = vadd.f32 0.0, %v827
        %v829 = vpop.f32.mrf.mxu0
        %830 = vmatprep.mubr.f32.mxu0 0.0
        %831 = vmatmul.mubr.f32.gmra.mxu0 %v707
        %v832 = vpop.f32.mrf.mxu0
        %v833 = vadd.f32 0.0, %v832
        %v834 = vpop.f32.mrf.mxu0
        %835 = vmatprep.mubr.f32.mxu0 0.0
        %836 = vmatmul.mubr.f32.gmra.mxu0 %v710
        %v837 = vpop.f32.mrf.mxu0
        %v838 = vadd.f32 0.0, %v837
        %v839 = vpop.f32.mrf.mxu0
        %840 = vmatprep.mubr.f32.mxu0 0.0
        %841 = vmatmul.mubr.f32.gmra.mxu0 %v713
        %v842 = vpop.f32.mrf.mxu0
        %v843 = vadd.f32 0.0, %v842
        %v844 = vpop.f32.mrf.mxu0
        %845 = vmatprep.mubr.f32.mxu0 0.0
        %846 = vmatmul.mubr.f32.gmra.mxu0 %v716
        %v847 = vpop.f32.mrf.mxu0
        %v848 = vadd.f32 0.0, %v847
        %v849 = vpop.f32.mrf.mxu0
        %850 = vmatprep.mubr.f32.mxu0 0.0
        %851 = vmatmul.mubr.f32.gmra.mxu0 %v719
        %v852 = vpop.f32.mrf.mxu0
        %v853 = vadd.f32 0.0, %v852
        %v854 = vpop.f32.mrf.mxu0
        %855 = vmatprep.mubr.f32.mxu0 0.0
        %856 = vmatmul.mubr.f32.gmra.mxu0 %v722
        %v857 = vpop.f32.mrf.mxu0
        %v858 = vadd.f32 0.0, %v857
        %v859 = vpop.f32.mrf.mxu0
        %860 = vmatprep.mubr.f32.mxu0 0.0
        %861 = vmatmul.mubr.f32.gmra.mxu0 %v725
        %v862 = vpop.f32.mrf.mxu0
        %v863 = vadd.f32 0.0, %v862
        %v864 = vpop.f32.mrf.mxu0
        %865 = vmatprep.mubr.f32.mxu0 0.0
        %866 = vmatmul.mubr.f32.gmra.mxu0 %v728
        %v867 = vpop.f32.mrf.mxu0
        %v868 = vadd.f32 0.0, %v867
        %v869 = vpop.f32.mrf.mxu0
        %870 = vmatprep.mubr.f32.mxu0 0.0
        %871 = vmatmul.mubr.f32.gmra.mxu0 %v731
        %v872 = vpop.f32.mrf.mxu0
        %v873 = vadd.f32 0.0, %v872
        %v874 = vpop.f32.mrf.mxu0
        %875 = vmatprep.mubr.f32.mxu0 0.0
        %876 = vmatmul.mubr.f32.gmra.mxu0 %v734
        %v877 = vpop.f32.mrf.mxu0
        %v878 = vadd.f32 0.0, %v877
        %v879 = vpop.f32.mrf.mxu0
        %880 = vdwg.mxu0
        %881 = vmax.xlane.f32.xlu0 %v803
        %v882 = vpop.xlane.xlu0 %881
        %883 = vmax.xlane.f32.xlu0 %v808
        %v884 = vpop.xlane.xlu0 %883
        %885 = vmax.xlane.f32.xlu0 %v813
        %v886 = vpop.xlane.xlu0 %885
        %887 = vmax.xlane.f32.xlu0 %v818
        %v888 = vpop.xlane.xlu0 %887
        %889 = vmax.xlane.f32.xlu0 %v823
        %v890 = vpop.xlane.xlu0 %889
        %891 = vmax.xlane.f32.xlu0 %v828
        %v892 = vpop.xlane.xlu0 %891
        %893 = vmax.xlane.f32.xlu0 %v833
        %v894 = vpop.xlane.xlu0 %893
        %895 = vmax.xlane.f32.xlu0 %v838
        %v896 = vpop.xlane.xlu0 %895
        %897 = vmax.xlane.f32.xlu0 %v843
        %v898 = vpop.xlane.xlu0 %897
        %899 = vmax.xlane.f32.xlu0 %v848
        %v900 = vpop.xlane.xlu0 %899
        %901 = vmax.xlane.f32.xlu0 %v853
        %v902 = vpop.xlane.xlu0 %901
        %903 = vmax.xlane.f32.xlu0 %v858
        %v904 = vpop.xlane.xlu0 %903
        %905 = vmax.xlane.f32.xlu0 %v863
        %v906 = vpop.xlane.xlu0 %905
        %907 = vmax.xlane.f32.xlu0 %v868
        %v908 = vpop.xlane.xlu0 %907
        %909 = vmax.xlane.f32.xlu0 %v873
        %v910 = vpop.xlane.xlu0 %909
        %911 = vmax.xlane.f32.xlu0 %v878
        %v912 = vpop.xlane.xlu0 %911
        %v913 = vsub.f32 %v803, %v882
        %v914 = vsub.f32 %v808, %v884
        %v915 = vsub.f32 %v813, %v886
        %v916 = vsub.f32 %v818, %v888
        %v917 = vsub.f32 %v823, %v890
        %v918 = vsub.f32 %v828, %v892
        %v919 = vsub.f32 %v833, %v894
        %v920 = vsub.f32 %v838, %v896
        %v921 = vsub.f32 %v843, %v898
        %v922 = vsub.f32 %v848, %v900
        %v923 = vsub.f32 %v853, %v902
        %v924 = vsub.f32 %v858, %v904
        %v925 = vsub.f32 %v863, %v906
        %v926 = vsub.f32 %v868, %v908
        %v927 = vsub.f32 %v873, %v910
        %v928 = vsub.f32 %v878, %v912
        %v929 = vmul.f32 %v913, 1.442695
        %v930 = vpow.pop %v929
        %v931 = vmul.f32 %v914, 1.442695
        %v932 = vpow.pop %v931
        %v933 = vmul.f32 %v915, 1.442695
        %v934 = vpow.pop %v933
        %v935 = vmul.f32 %v916, 1.442695
        %v936 = vpow.pop %v935
        %v937 = vmul.f32 %v917, 1.442695
        %v938 = vpow.pop %v937
        %v939 = vmul.f32 %v918, 1.442695
        %v940 = vpow.pop %v939
        %v941 = vmul.f32 %v919, 1.442695
        %v942 = vpow.pop %v941
        %v943 = vmul.f32 %v920, 1.442695
        %v944 = vpow.pop %v943
        %v945 = vmul.f32 %v921, 1.442695
        %v946 = vpow.pop %v945
        %v947 = vmul.f32 %v922, 1.442695
        %v948 = vpow.pop %v947
        %v949 = vmul.f32 %v923, 1.442695
        %v950 = vpow.pop %v949
        %v951 = vmul.f32 %v924, 1.442695
        %v952 = vpow.pop %v951
        %v953 = vmul.f32 %v925, 1.442695
        %v954 = vpow.pop %v953
        %v955 = vmul.f32 %v926, 1.442695
        %v956 = vpow.pop %v955
        %v957 = vmul.f32 %v927, 1.442695
        %v958 = vpow.pop %v957
        %v959 = vmul.f32 %v928, 1.442695
        %v960 = vpow.pop %v959
        %961 = vmatprep.subr.mxu0 0.0
        %962 = vmatpush1.xpose.msra.mxu0 %v960
        %963 = vmatprep.subr.mxu0 0.0
        %964 = vmatpush1.xpose.msra.mxu0 %v958
        %965 = vmatprep.subr.mxu0 0.0
        %966 = vmatpush1.xpose.msra.mxu0 %v956
        %967 = vmatprep.subr.mxu0 0.0
        %968 = vmatpush1.xpose.msra.mxu0 %v954
        %969 = vmatprep.subr.mxu0 0.0
        %970 = vmatpush1.xpose.msra.mxu0 %v952
        %971 = vmatprep.subr.mxu0 0.0
        %972 = vmatpush1.xpose.msra.mxu0 %v950
        %973 = vmatprep.subr.mxu0 0.0
        %974 = vmatpush1.xpose.msra.mxu0 %v948
        %975 = vmatprep.subr.mxu0 0.0
        %976 = vmatpush1.xpose.msra.mxu0 %v946
        %977 = vmatprep.subr.mxu0 0.0
        %978 = vmatpush1.xpose.msra.mxu0 %v944
        %979 = vmatprep.subr.mxu0 0.0
        %980 = vmatpush1.xpose.msra.mxu0 %v942
        %981 = vmatprep.subr.mxu0 0.0
        %982 = vmatpush1.xpose.msra.mxu0 %v940
        %983 = vmatprep.subr.mxu0 0.0
        %984 = vmatpush1.xpose.msra.mxu0 %v938
        %985 = vmatprep.subr.mxu0 0.0
        %986 = vmatpush1.xpose.msra.mxu0 %v936
        %987 = vmatprep.subr.mxu0 0.0
        %988 = vmatpush1.xpose.msra.mxu0 %v934
        %989 = vmatprep.subr.mxu0 0.0
        %990 = vmatpush1.xpose.msra.mxu0 %v932
        %991 = vmatprep.subr.mxu0 0.0
        %992 = vmatpush1.xpose.msra.mxu0 %v930
        %993 = vmatprep.subr.mxu0 0.0
        %994 = vmatpush2.xpose.msra.mxu0 0.0
        %995 = vmatprep.subr.mxu0 0.0
        %996 = vmatpush2.xpose.msra.mxu0 0.0
        %997 = vmatprep.subr.mxu0 0.0
        %998 = vmatpush2.xpose.msra.mxu0 0.0
        %999 = vmatprep.subr.mxu0 0.0
        %1000 = vmatpush2.xpose.msra.mxu0 0.0
        %1001 = vmatprep.subr.mxu0 0.0
        %1002 = vmatpush2.xpose.msra.mxu0 0.0
        %1003 = vmatprep.subr.mxu0 0.0
        %1004 = vmatpush2.xpose.msra.mxu0 0.0
        %1005 = vmatprep.subr.mxu0 0.0
        %1006 = vmatpush2.xpose.msra.mxu0 0.0
        %1007 = vmatprep.subr.mxu0 0.0
        %1008 = vmatpush2.xpose.msra.mxu0 0.0
        %1009 = vmatprep.subr.mxu0 0.0
        %1010 = vmatpush2.xpose.msra.mxu0 0.0
        %1011 = vmatprep.subr.mxu0 0.0
        %1012 = vmatpush2.xpose.msra.mxu0 0.0
        %1013 = vmatprep.subr.mxu0 0.0
        %1014 = vmatpush2.xpose.msra.mxu0 0.0
        %1015 = vmatprep.subr.mxu0 0.0
        %1016 = vmatpush2.xpose.msra.mxu0 0.0
        %1017 = vmatprep.subr.mxu0 0.0
        %1018 = vmatpush2.xpose.msra.mxu0 0.0
        %1019 = vmatprep.subr.mxu0 0.0
        %1020 = vmatpush2.xpose.msra.mxu0 0.0
        %1021 = vmatprep.subr.mxu0 0.0
        %1022 = vmatpush2.xpose.msra.mxu0 0.0
        %1023 = vmatprep.subr.mxu0 0.0
        %1024 = vmatpush2.xpose.msra.mxu0 0.0
        %1025 = vmatprep.mubr.f32.mxu0 0.0
        %1026 = vmatmul.mubr.f32.gmra.mxu0 %v652
        %v1027 = vpop.f32.mrf.mxu0
        %v1028 = vadd.f32 0.0, %v1027
        %v1029 = vpop.f32.mrf.mxu0
        %1030 = vmatprep.mubr.f32.mxu0 0.0
        %1031 = vmatmul.mubr.f32.gmra.mxu0 %v653
        %v1032 = vpop.f32.mrf.mxu0
        %v1033 = vadd.f32 0.0, %v1032
        %v1034 = vpop.f32.mrf.mxu0
        %1035 = vmatprep.mubr.f32.mxu0 0.0
        %1036 = vmatmul.mubr.f32.gmra.mxu0 %v654
        %v1037 = vpop.f32.mrf.mxu0
        %v1038 = vadd.f32 0.0, %v1037
        %v1039 = vpop.f32.mrf.mxu0
        %1040 = vdwg.mxu0
        %v1041 = vrcp.pop %v1038
        %v1042 = vlaneseq
        %v1043 = vshrl.u32 %v1042, 7
        %v1044 = vsub.s32 0, %v1043
        %v1045 = vrot.slane %v1041, %v1044
        %v1046 = vmul.f32 %v1028, %v1045
        %v1047 = vmul.f32 %v1033, %v1045
        %v1048 = vadd.f32 %v647, %v1046
        %v1049 = vadd.f32 %v648, %v1047
        %v1050 = vand.u32 2147483647, %v1048
        %v1051 = vand.u32 2147483647, %v1049
        %v1052 = vadd.f32 %v1050, %v1051
        %v1053 = vrot.slane %v1052, 4
        %v1054 = vadd.f32 %v1052, %v1053
        %v1055 = vrot.slane %v1054, 2
        %v1056 = vadd.f32 %v1054, %v1055
        %v1057 = vrot.slane %v1056, 1
        %v1058 = vadd.f32 %v1056, %v1057
        %1059 = vst [vmem:[%s273] sm:$0x1] %v1058
        %s1060 = scalar_lea.vmem [#allocation3], %s644
        %v1061 = vld [vmem:[%s1060] sm:$0xff]
        %v1062 = vld [vmem:[#allocation3 + $0x8] sm:$0xff]
        %v1063 = vld [vmem:[#allocation2 + $0x10] sm:$0xff]
        %v1064 = vld [vmem:[#allocation2 + $0x18] sm:$0xff]
        %v1065 = vld [vmem:[#allocation2 + $0x20] sm:$0xff]
        %1066 = vxpose.xlu0.b32.start [1/16] %v1061, 128
        %1067 = vxpose.xlu0.b32.cont [2/16] 0.0, 128
        %1068 = vxpose.xlu0.b32.cont [3/16] 0.0, 128
        %1069 = vxpose.xlu0.b32.cont [4/16] 0.0, 128
        %1070 = vxpose.xlu0.b32.cont [5/16] 0.0, 128
        %1071 = vxpose.xlu0.b32.cont [6/16] 0.0, 128
        %1072 = vxpose.xlu0.b32.cont [7/16] 0.0, 128
        %1073 = vxpose.xlu0.b32.cont [8/16] 0.0, 128
        %1074 = vxpose.xlu0.b32.cont [9/16] 0.0, 128
        %1075 = vxpose.xlu0.b32.cont [10/16] 0.0, 128
        %1076 = vxpose.xlu0.b32.cont [11/16] 0.0, 128
        %1077 = vxpose.xlu0.b32.cont [12/16] 0.0, 128
        %1078 = vxpose.xlu0.b32.cont [13/16] 0.0, 128
        %1079 = vxpose.xlu0.b32.cont [14/16] 0.0, 128
        %1080 = vxpose.xlu0.b32.cont [15/16] 0.0, 128
        %1081 = vxpose.xlu0.b32.end [16/16] 0.0, 128
        %v1082 = vpop.trf.xlu0
        %v1083 = vpop.trf.xlu0
        %v1084 = vpop.trf.xlu0
        %v1085 = vpop.trf.xlu0
        %v1086 = vpop.trf.xlu0
        %v1087 = vpop.trf.xlu0
        %v1088 = vpop.trf.xlu0
        %v1089 = vpop.trf.xlu0
        %v1090 = vpop.trf.xlu0
        %v1091 = vpop.trf.xlu0
        %v1092 = vpop.trf.xlu0
        %v1093 = vpop.trf.xlu0
        %v1094 = vpop.trf.xlu0
        %v1095 = vpop.trf.xlu0
        %v1096 = vpop.trf.xlu0
        %v1097 = vpop.trf.xlu0
        %v1099 = vsel %vm687, %v1082, 0
        %v1102 = vsel %vm687, %v1083, 0
        %v1105 = vsel %vm687, %v1084, 0
        %v1108 = vsel %vm687, %v1085, 0
        %v1111 = vsel %vm687, %v1086, 0
        %v1114 = vsel %vm687, %v1087, 0
        %v1117 = vsel %vm687, %v1088, 0
        %v1120 = vsel %vm687, %v1089, 0
        %v1123 = vsel %vm687, %v1090, 0
        %v1126 = vsel %vm687, %v1091, 0
        %v1129 = vsel %vm687, %v1092, 0
        %v1132 = vsel %vm687, %v1093, 0
        %v1135 = vsel %vm687, %v1094, 0
        %v1138 = vsel %vm687, %v1095, 0
        %v1141 = vsel %vm687, %v1096, 0
        %v1144 = vsel %vm687, %v1097, 0
        %1146 = vmatprep.subr.mxu0 0.0
        %1147 = vmatpush1.msra.mxu0 0.0
        %1148 = vmatprep.subr.mxu0 0.0
        %1149 = vmatpush1.msra.mxu0 0.0
        %1150 = vmatprep.subr.mxu0 0.0
        %1151 = vmatpush1.msra.mxu0 0.0
        %1152 = vmatprep.subr.mxu0 0.0
        %1153 = vmatpush1.msra.mxu0 0.0
        %1154 = vmatprep.subr.mxu0 0.0
        %1155 = vmatpush1.msra.mxu0 0.0
        %1156 = vmatprep.subr.mxu0 0.0
        %1157 = vmatpush1.msra.mxu0 0.0
        %1158 = vmatprep.subr.mxu0 0.0
        %1159 = vmatpush1.msra.mxu0 0.0
        %1160 = vmatprep.subr.mxu0 0.0
        %1161 = vmatpush1.msra.mxu0 0.0
        %1162 = vmatprep.subr.mxu0 0.0
        %1163 = vmatpush1.msra.mxu0 0.0
        %1164 = vmatprep.subr.mxu0 0.0
        %1165 = vmatpush1.msra.mxu0 0.0
        %1166 = vmatprep.subr.mxu0 0.0
        %1167 = vmatpush1.msra.mxu0 0.0
        %1168 = vmatprep.subr.mxu0 0.0
        %1169 = vmatpush1.msra.mxu0 0.0
        %1170 = vmatprep.subr.mxu0 0.0
        %1171 = vmatpush1.msra.mxu0 0.0
        %1172 = vmatprep.subr.mxu0 0.0
        %1173 = vmatpush1.msra.mxu0 0.0
        %1174 = vmatprep.subr.mxu0 0.0
        %1175 = vmatpush1.msra.mxu0 0.0
        %1176 = vmatprep.subr.mxu0 0.0
        %1177 = vmatpush1.msra.mxu0 %v1062
        %1178 = vmatprep.subr.mxu0 0.0
        %1179 = vmatpush2.msra.mxu0 0.0
        %1180 = vmatprep.subr.mxu0 0.0
        %1181 = vmatpush2.msra.mxu0 0.0
        %1182 = vmatprep.subr.mxu0 0.0
        %1183 = vmatpush2.msra.mxu0 0.0
        %1184 = vmatprep.subr.mxu0 0.0
        %1185 = vmatpush2.msra.mxu0 0.0
        %1186 = vmatprep.subr.mxu0 0.0
        %1187 = vmatpush2.msra.mxu0 0.0
        %1188 = vmatprep.subr.mxu0 0.0
        %1189 = vmatpush2.msra.mxu0 0.0
        %1190 = vmatprep.subr.mxu0 0.0
        %1191 = vmatpush2.msra.mxu0 0.0
        %1192 = vmatprep.subr.mxu0 0.0
        %1193 = vmatpush2.msra.mxu0 0.0
        %1194 = vmatprep.subr.mxu0 0.0
        %1195 = vmatpush2.msra.mxu0 0.0
        %1196 = vmatprep.subr.mxu0 0.0
        %1197 = vmatpush2.msra.mxu0 0.0
        %1198 = vmatprep.subr.mxu0 0.0
        %1199 = vmatpush2.msra.mxu0 0.0
        %1200 = vmatprep.subr.mxu0 0.0
        %1201 = vmatpush2.msra.mxu0 0.0
        %1202 = vmatprep.subr.mxu0 0.0
        %1203 = vmatpush2.msra.mxu0 0.0
        %1204 = vmatprep.subr.mxu0 0.0
        %1205 = vmatpush2.msra.mxu0 0.0
        %1206 = vmatprep.subr.mxu0 0.0
        %1207 = vmatpush2.msra.mxu0 0.0
        %1208 = vmatprep.subr.mxu0 0.0
        %1209 = vmatpush2.msra.mxu0 0.0
        %1210 = vmatprep.mubr.f32.mxu0 0.0
        %1211 = vmatmul.mubr.f32.gmra.mxu0 %v1099
        %v1212 = vpop.f32.mrf.mxu0
        %v1213 = vadd.f32 0.0, %v1212
        %v1214 = vpop.f32.mrf.mxu0
        %1215 = vmatprep.mubr.f32.mxu0 0.0
        %1216 = vmatmul.mubr.f32.gmra.mxu0 %v1102
        %v1217 = vpop.f32.mrf.mxu0
        %v1218 = vadd.f32 0.0, %v1217
        %v1219 = vpop.f32.mrf.mxu0
        %1220 = vmatprep.mubr.f32.mxu0 0.0
        %1221 = vmatmul.mubr.f32.gmra.mxu0 %v1105
        %v1222 = vpop.f32.mrf.mxu0
        %v1223 = vadd.f32 0.0, %v1222
        %v1224 = vpop.f32.mrf.mxu0
        %1225 = vmatprep.mubr.f32.mxu0 0.0
        %1226 = vmatmul.mubr.f32.gmra.mxu0 %v1108
        %v1227 = vpop.f32.mrf.mxu0
        %v1228 = vadd.f32 0.0, %v1227
        %v1229 = vpop.f32.mrf.mxu0
        %1230 = vmatprep.mubr.f32.mxu0 0.0
        %1231 = vmatmul.mubr.f32.gmra.mxu0 %v1111
        %v1232 = vpop.f32.mrf.mxu0
        %v1233 = vadd.f32 0.0, %v1232
        %v1234 = vpop.f32.mrf.mxu0
        %1235 = vmatprep.mubr.f32.mxu0 0.0
        %1236 = vmatmul.mubr.f32.gmra.mxu0 %v1114
        %v1237 = vpop.f32.mrf.mxu0
        %v1238 = vadd.f32 0.0, %v1237
        %v1239 = vpop.f32.mrf.mxu0
        %1240 = vmatprep.mubr.f32.mxu0 0.0
        %1241 = vmatmul.mubr.f32.gmra.mxu0 %v1117
        %v1242 = vpop.f32.mrf.mxu0
        %v1243 = vadd.f32 0.0, %v1242
        %v1244 = vpop.f32.mrf.mxu0
        %1245 = vmatprep.mubr.f32.mxu0 0.0
        %1246 = vmatmul.mubr.f32.gmra.mxu0 %v1120
        %v1247 = vpop.f32.mrf.mxu0
        %v1248 = vadd.f32 0.0, %v1247
        %v1249 = vpop.f32.mrf.mxu0
        %1250 = vmatprep.mubr.f32.mxu0 0.0
        %1251 = vmatmul.mubr.f32.gmra.mxu0 %v1123
        %v1252 = vpop.f32.mrf.mxu0
        %v1253 = vadd.f32 0.0, %v1252
        %v1254 = vpop.f32.mrf.mxu0
        %1255 = vmatprep.mubr.f32.mxu0 0.0
        %1256 = vmatmul.mubr.f32.gmra.mxu0 %v1126
        %v1257 = vpop.f32.mrf.mxu0
        %v1258 = vadd.f32 0.0, %v1257
        %v1259 = vpop.f32.mrf.mxu0
        %1260 = vmatprep.mubr.f32.mxu0 0.0
        %1261 = vmatmul.mubr.f32.gmra.mxu0 %v1129
        %v1262 = vpop.f32.mrf.mxu0
        %v1263 = vadd.f32 0.0, %v1262
        %v1264 = vpop.f32.mrf.mxu0
        %1265 = vmatprep.mubr.f32.mxu0 0.0
        %1266 = vmatmul.mubr.f32.gmra.mxu0 %v1132
        %v1267 = vpop.f32.mrf.mxu0
        %v1268 = vadd.f32 0.0, %v1267
        %v1269 = vpop.f32.mrf.mxu0
        %1270 = vmatprep.mubr.f32.mxu0 0.0
        %1271 = vmatmul.mubr.f32.gmra.mxu0 %v1135
        %v1272 = vpop.f32.mrf.mxu0
        %v1273 = vadd.f32 0.0, %v1272
        %v1274 = vpop.f32.mrf.mxu0
        %1275 = vmatprep.mubr.f32.mxu0 0.0
        %1276 = vmatmul.mubr.f32.gmra.mxu0 %v1138
        %v1277 = vpop.f32.mrf.mxu0
        %v1278 = vadd.f32 0.0, %v1277
        %v1279 = vpop.f32.mrf.mxu0
        %1280 = vmatprep.mubr.f32.mxu0 0.0
        %1281 = vmatmul.mubr.f32.gmra.mxu0 %v1141
        %v1282 = vpop.f32.mrf.mxu0
        %v1283 = vadd.f32 0.0, %v1282
        %v1284 = vpop.f32.mrf.mxu0
        %1285 = vmatprep.mubr.f32.mxu0 0.0
        %1286 = vmatmul.mubr.f32.gmra.mxu0 %v1144
        %v1287 = vpop.f32.mrf.mxu0
        %v1288 = vadd.f32 0.0, %v1287
        %v1289 = vpop.f32.mrf.mxu0
        %1290 = vdwg.mxu0
        %1291 = vmax.xlane.f32.xlu0 %v1213
        %v1292 = vpop.xlane.xlu0 %1291
        %1293 = vmax.xlane.f32.xlu0 %v1218
        %v1294 = vpop.xlane.xlu0 %1293
        %1295 = vmax.xlane.f32.xlu0 %v1223
        %v1296 = vpop.xlane.xlu0 %1295
        %1297 = vmax.xlane.f32.xlu0 %v1228
        %v1298 = vpop.xlane.xlu0 %1297
        %1299 = vmax.xlane.f32.xlu0 %v1233
        %v1300 = vpop.xlane.xlu0 %1299
        %1301 = vmax.xlane.f32.xlu0 %v1238
        %v1302 = vpop.xlane.xlu0 %1301
        %1303 = vmax.xlane.f32.xlu0 %v1243
        %v1304 = vpop.xlane.xlu0 %1303
        %1305 = vmax.xlane.f32.xlu0 %v1248
        %v1306 = vpop.xlane.xlu0 %1305
        %1307 = vmax.xlane.f32.xlu0 %v1253
        %v1308 = vpop.xlane.xlu0 %1307
        %1309 = vmax.xlane.f32.xlu0 %v1258
        %v1310 = vpop.xlane.xlu0 %1309
        %1311 = vmax.xlane.f32.xlu0 %v1263
        %v1312 = vpop.xlane.xlu0 %1311
        %1313 = vmax.xlane.f32.xlu0 %v1268
        %v1314 = vpop.xlane.xlu0 %1313
        %1315 = vmax.xlane.f32.xlu0 %v1273
        %v1316 = vpop.xlane.xlu0 %1315
        %1317 = vmax.xlane.f32.xlu0 %v1278
        %v1318 = vpop.xlane.xlu0 %1317
        %1319 = vmax.xlane.f32.xlu0 %v1283
        %v1320 = vpop.xlane.xlu0 %1319
        %1321 = vmax.xlane.f32.xlu0 %v1288
        %v1322 = vpop.xlane.xlu0 %1321
        %v1323 = vsub.f32 %v1213, %v1292
        %v1324 = vsub.f32 %v1218, %v1294
        %v1325 = vsub.f32 %v1223, %v1296
        %v1326 = vsub.f32 %v1228, %v1298
        %v1327 = vsub.f32 %v1233, %v1300
        %v1328 = vsub.f32 %v1238, %v1302
        %v1329 = vsub.f32 %v1243, %v1304
        %v1330 = vsub.f32 %v1248, %v1306
        %v1331 = vsub.f32 %v1253, %v1308
        %v1332 = vsub.f32 %v1258, %v1310
        %v1333 = vsub.f32 %v1263, %v1312
        %v1334 = vsub.f32 %v1268, %v1314
        %v1335 = vsub.f32 %v1273, %v1316
        %v1336 = vsub.f32 %v1278, %v1318
        %v1337 = vsub.f32 %v1283, %v1320
        %v1338 = vsub.f32 %v1288, %v1322
        %v1339 = vmul.f32 %v1323, 1.442695
        %v1340 = vpow.pop %v1339
        %v1341 = vmul.f32 %v1324, 1.442695
        %v1342 = vpow.pop %v1341
        %v1343 = vmul.f32 %v1325, 1.442695
        %v1344 = vpow.pop %v1343
        %v1345 = vmul.f32 %v1326, 1.442695
        %v1346 = vpow.pop %v1345
        %v1347 = vmul.f32 %v1327, 1.442695
        %v1348 = vpow.pop %v1347
        %v1349 = vmul.f32 %v1328, 1.442695
        %v1350 = vpow.pop %v1349
        %v1351 = vmul.f32 %v1329, 1.442695
        %v1352 = vpow.pop %v1351
        %v1353 = vmul.f32 %v1330, 1.442695
        %v1354 = vpow.pop %v1353
        %v1355 = vmul.f32 %v1331, 1.442695
        %v1356 = vpow.pop %v1355
        %v1357 = vmul.f32 %v1332, 1.442695
        %v1358 = vpow.pop %v1357
        %v1359 = vmul.f32 %v1333, 1.442695
        %v1360 = vpow.pop %v1359
        %v1361 = vmul.f32 %v1334, 1.442695
        %v1362 = vpow.pop %v1361
        %v1363 = vmul.f32 %v1335, 1.442695
        %v1364 = vpow.pop %v1363
        %v1365 = vmul.f32 %v1336, 1.442695
        %v1366 = vpow.pop %v1365
        %v1367 = vmul.f32 %v1337, 1.442695
        %v1368 = vpow.pop %v1367
        %v1369 = vmul.f32 %v1338, 1.442695
        %v1370 = vpow.pop %v1369
        %1371 = vmatprep.subr.mxu0 0.0
        %1372 = vmatpush1.xpose.msra.mxu0 %v1370
        %1373 = vmatprep.subr.mxu0 0.0
        %1374 = vmatpush1.xpose.msra.mxu0 %v1368
        %1375 = vmatprep.subr.mxu0 0.0
        %1376 = vmatpush1.xpose.msra.mxu0 %v1366
        %1377 = vmatprep.subr.mxu0 0.0
        %1378 = vmatpush1.xpose.msra.mxu0 %v1364
        %1379 = vmatprep.subr.mxu0 0.0
        %1380 = vmatpush1.xpose.msra.mxu0 %v1362
        %1381 = vmatprep.subr.mxu0 0.0
        %1382 = vmatpush1.xpose.msra.mxu0 %v1360
        %1383 = vmatprep.subr.mxu0 0.0
        %1384 = vmatpush1.xpose.msra.mxu0 %v1358
        %1385 = vmatprep.subr.mxu0 0.0
        %1386 = vmatpush1.xpose.msra.mxu0 %v1356
        %1387 = vmatprep.subr.mxu0 0.0
        %1388 = vmatpush1.xpose.msra.mxu0 %v1354
        %1389 = vmatprep.subr.mxu0 0.0
        %1390 = vmatpush1.xpose.msra.mxu0 %v1352
        %1391 = vmatprep.subr.mxu0 0.0
        %1392 = vmatpush1.xpose.msra.mxu0 %v1350
        %1393 = vmatprep.subr.mxu0 0.0
        %1394 = vmatpush1.xpose.msra.mxu0 %v1348
        %1395 = vmatprep.subr.mxu0 0.0
        %1396 = vmatpush1.xpose.msra.mxu0 %v1346
        %1397 = vmatprep.subr.mxu0 0.0
        %1398 = vmatpush1.xpose.msra.mxu0 %v1344
        %1399 = vmatprep.subr.mxu0 0.0
        %1400 = vmatpush1.xpose.msra.mxu0 %v1342
        %1401 = vmatprep.subr.mxu0 0.0
        %1402 = vmatpush1.xpose.msra.mxu0 %v1340
        %1403 = vmatprep.subr.mxu0 0.0
        %1404 = vmatpush2.xpose.msra.mxu0 0.0
        %1405 = vmatprep.subr.mxu0 0.0
        %1406 = vmatpush2.xpose.msra.mxu0 0.0
        %1407 = vmatprep.subr.mxu0 0.0
        %1408 = vmatpush2.xpose.msra.mxu0 0.0
        %1409 = vmatprep.subr.mxu0 0.0
        %1410 = vmatpush2.xpose.msra.mxu0 0.0
        %1411 = vmatprep.subr.mxu0 0.0
        %1412 = vmatpush2.xpose.msra.mxu0 0.0
        %1413 = vmatprep.subr.mxu0 0.0
        %1414 = vmatpush2.xpose.msra.mxu0 0.0
        %1415 = vmatprep.subr.mxu0 0.0
        %1416 = vmatpush2.xpose.msra.mxu0 0.0
        %1417 = vmatprep.subr.mxu0 0.0
        %1418 = vmatpush2.xpose.msra.mxu0 0.0
        %1419 = vmatprep.subr.mxu0 0.0
        %1420 = vmatpush2.xpose.msra.mxu0 0.0
        %1421 = vmatprep.subr.mxu0 0.0
        %1422 = vmatpush2.xpose.msra.mxu0 0.0
        %1423 = vmatprep.subr.mxu0 0.0
        %1424 = vmatpush2.xpose.msra.mxu0 0.0
        %1425 = vmatprep.subr.mxu0 0.0
        %1426 = vmatpush2.xpose.msra.mxu0 0.0
        %1427 = vmatprep.subr.mxu0 0.0
        %1428 = vmatpush2.xpose.msra.mxu0 0.0
        %1429 = vmatprep.subr.mxu0 0.0
        %1430 = vmatpush2.xpose.msra.mxu0 0.0
        %1431 = vmatprep.subr.mxu0 0.0
        %1432 = vmatpush2.xpose.msra.mxu0 0.0
        %1433 = vmatprep.subr.mxu0 0.0
        %1434 = vmatpush2.xpose.msra.mxu0 0.0
        %1435 = vmatprep.mubr.f32.mxu0 0.0
        %1436 = vmatmul.mubr.f32.gmra.mxu0 %v1063
        %v1437 = vpop.f32.mrf.mxu0
        %v1438 = vadd.f32 0.0, %v1437
        %v1439 = vpop.f32.mrf.mxu0
        %1440 = vmatprep.mubr.f32.mxu0 0.0
        %1441 = vmatmul.mubr.f32.gmra.mxu0 %v1064
        %v1442 = vpop.f32.mrf.mxu0
        %v1443 = vadd.f32 0.0, %v1442
        %v1444 = vpop.f32.mrf.mxu0
        %1445 = vmatprep.mubr.f32.mxu0 0.0
        %1446 = vmatmul.mubr.f32.gmra.mxu0 %v1065
        %v1447 = vpop.f32.mrf.mxu0
        %v1448 = vadd.f32 0.0, %v1447
        %v1449 = vpop.f32.mrf.mxu0
        %1450 = vdwg.mxu0
        %v1451 = vrcp.pop %v1448
        %v1452 = vlaneseq
        %v1453 = vshrl.u32 %v1452, 7
        %v1454 = vsub.s32 0, %v1453
        %v1455 = vrot.slane %v1451, %v1454
        %v1456 = vmul.f32 %v1438, %v1455
        %v1457 = vmul.f32 %v1443, %v1455
        %v1458 = vadd.f32 %v647, %v1456
        %v1459 = vadd.f32 %v648, %v1457
        %v1460 = vand.u32 2147483647, %v1458
        %v1461 = vand.u32 2147483647, %v1459
        %v1462 = vadd.f32 %v1460, %v1461
        %v1463 = vrot.slane %v1462, 4
        %v1464 = vadd.f32 %v1462, %v1463
        %v1465 = vrot.slane %v1464, 2
        %v1466 = vadd.f32 %v1464, %v1465
        %v1467 = vrot.slane %v1466, 1
        %v1468 = vadd.f32 %v1466, %v1467
        %1469 = vst [vmem:[%s273 + $0x1] sm:$0x1] %v1468
        %s1470 = sand.u32 %s178, 1
        %s1471 = scalar_lea.sflag [#allocation6], %s1470
        %s1472 = sand.u32 %s178, 1
        %s1473 = smul.addr %s1472, 2
        %s1474 = scalar_lea.vmem [#allocation5], %s1473
        // Predicated region
        $region49: #{tpu_custom_call.1} parent=43 // pred_check
          %p1475 = pneg %p188
        $region50: #{tpu_custom_call.1} parent=43 // pred_check_branch
          %1477 = sbr.rel (%p1475) target = $region52
        $region51: #{tpu_custom_call.1} parent=43 // pred_region
          %s1479 = ssub.s32 32, 32
          %1480 = vsyncadd %s1471, %s1479
          %s1481 = sadd.s32 %s25, %s24
          %s1482 = smul.addr %s1481, 32
          %s1483 = scalar_lea.hbm %s6, %s1482
          %s1485 = sshll.u32 %s1474, 4
          %s1486 = int_to_ptr.vmem [resolvable:$true] %s1485
          %1488 = dma.vmem_to_hbm [thread:$0]  %s1486, 32, %s1483, %s1471
        $region52: #{tpu_custom_call.1} parent=43 // pred_fallthru
          _
      $region44: #{tpu_custom_call.1} parent=5 // pred_fallthru
        _
      %p1489 = scmp.le.s32.totalorder 2, %s15
      // Predicated region
      $region53: #{tpu_custom_call.1} parent=5 // pred_check
        %p1490 = pneg %p1489
      $region54: #{tpu_custom_call.1} parent=5 // pred_check_branch
        %1492 = sbr.rel (%p1490) target = $region56
      $region55: #{tpu_custom_call.1} parent=5 // pred_region
        %s1493 = ssub.s32 %s15, 2
        // Predicated region
        $region57: #{tpu_custom_call.1} parent=55 // pred_check
          %p1494 = pneg %p194
        $region58: #{tpu_custom_call.1} parent=55 // pred_check_branch
          %1496 = sbr.rel (%p1494) target = $region60
        $region59: #{tpu_custom_call.1} parent=55 // pred_region
          %s1497 = sand.u32 %s179, 1
          %s1498 = scalar_lea.sflag [#allocation6], %s1497
          %s1499 = sand.u32 %s179, 1
          %s1500 = smul.addr %s1499, 2
          %s1501 = scalar_lea.vmem [#allocation5], %s1500
          %1502 = dma.done %s1498, 32
        $region60: #{tpu_custom_call.1} parent=55 // pred_fallthru
          _
      $region56: #{tpu_custom_call.1} parent=5 // pred_fallthru
        _
    $region6: #{tpu_custom_call.1} parent=1 // loop_footer
      %s19 = sadd.s32 1, %s15
    $region7: #{tpu_custom_call.1} parent=1 // loop_footer_branch
      %14 = sbr.rel target = $region3
    $region8: #{tpu_custom_call.1} parent=1 // loop_exit
      _
    %1503 = vsyncpa [#allocation6], 1
    %s1504 = scalar_lea.sflag [#allocation6], 1
    %1505 = vsyncpa %s1504, 1

</llo_original>
